<compile_context>
chip_gen: v7x
topology: tpu7x:2x2x1
jax: 0.10.0
libtpu: 0.0.40
codegen_flags: <defaults>
</compile_context>

<pallas_src>
import functools
import math

import jax
import jax.numpy as jnp
from jax.experimental import pallas as pl
from jax.experimental.pallas import tpu as pltpu

PAD = 128          # lane-dense width for the classifier/fc head
VEC_ROWS = 16      # rows in the packed per-layer vector tensor
# rows of the packed per-layer vector tensor (L, VEC_ROWS, max(H, I))
ROW_BQ, ROW_BK, ROW_BV, ROW_BO = 0, 1, 2, 3
ROW_LN1_G, ROW_LN1_B = 4, 5
ROW_B2, ROW_LN2_G, ROW_LN2_B = 6, 7, 8
ROW_B1 = 9
# rows of the packed head vector tensor (8, PAD)
ROW_EMB_G, ROW_EMB_B, ROW_POOL_B, ROW_CLS_B, ROW_FC_B = 0, 1, 2, 3, 4
HEADV_ROWS = 8


# ---------------------------------------------------------------------------
# Fused whole-model kernel (grid axis = encoder layer)
# ---------------------------------------------------------------------------

def _bert_kernel(
    x_emb_hbm, mask_ref, wqkv_ref, wo_ref, w1_ref, w2_ref,
    lvec_ref, headw_ref, headv_ref,
    out_ref, x_vmem,
    *, num_heads, batch, seq, hidden, inter, eps,
):
    l = pl.program_id(0)
    H, I = hidden, inter
    Dh = H // num_heads

    def layer_norm(y, g, b):
        mu = jnp.mean(y, axis=-1, keepdims=True)
        var = jnp.mean((y - mu) ** 2, axis=-1, keepdims=True)
        return (y - mu) * jax.lax.rsqrt(var + eps) * g + b

    def lvec(row, width):
        return lvec_ref[0, row:row + 1, :width]          # (1, width) f32

    # --- first grid step: DMA the embeddings from HBM exactly once, then
    #     embedding LayerNorm into the resident VMEM activation. ---
    @pl.when(l == 0)
    def _():
        pltpu.sync_copy(x_emb_hbm, x_vmem)
        x_vmem[...] = layer_norm(
            x_vmem[...],
            headv_ref[ROW_EMB_G:ROW_EMB_G + 1, :H],
            headv_ref[ROW_EMB_B:ROW_EMB_B + 1, :H])

    x = x_vmem[...]                                      # (B*S, H) f32, resident
    x_bf = x.astype(jnp.bfloat16)

    # --- Q/K/V: three leading-indexed (H,H) matmuls -> no lane slicing of the
    #     projection output; 1/sqrt(Dh) already folded into the Q weights/bias. ---
    q = jnp.dot(x_bf, wqkv_ref[0, 0], preferred_element_type=jnp.float32) + lvec(ROW_BQ, H)
    k = jnp.dot(x_bf, wqkv_ref[0, 1], preferred_element_type=jnp.float32) + lvec(ROW_BK, H)
    v = jnp.dot(x_bf, wqkv_ref[0, 2], preferred_element_type=jnp.float32) + lvec(ROW_BV, H)
    q = q.reshape(batch, seq, H)
    k = k.reshape(batch, seq, H)
    v = v.reshape(batch, seq, H)

    mask_add = mask_ref[...]                             # (B, 1, S) additive mask, f32
    k_bf = k.astype(jnp.bfloat16)

    # --- attention: heads selected by lane-aligned masks (VPU) instead of 8-lane
    #     extracts (XLU relayout); each head's context accumulates in place into
    #     the full-width ctx so the lane-dim concatenate disappears. ---
    lane = jax.lax.broadcasted_iota(jnp.int32, (1, 1, H), 2)
    ctx = jnp.zeros((batch, seq, H), jnp.float32)
    for h in range(num_heads):
        head_sel = (lane >= h * Dh) & (lane < (h + 1) * Dh)
        qh = jnp.where(head_sel, q, 0.0).astype(jnp.bfloat16)
        s = jnp.einsum('bqd,bkd->bqk', qh, k_bf,
                       preferred_element_type=jnp.float32)
        s = s + mask_add                                 # broadcast over query rows
        s = s - jnp.max(s, axis=-1, keepdims=True)
        p = jnp.exp(s)
        p = p * pl.reciprocal(jnp.sum(p, axis=-1, keepdims=True), approx=True)
        vh = jnp.where(head_sel, v, 0.0).astype(jnp.bfloat16)
        ctx = ctx + jnp.einsum('bqk,bkd->bqd', p.astype(jnp.bfloat16), vh,
                               preferred_element_type=jnp.float32)
    ctx = ctx.reshape(batch * seq, H)

    # --- attention output projection + residual + LN (f32 epilogue) ---
    attn = (jnp.dot(ctx.astype(jnp.bfloat16), wo_ref[0],
                    preferred_element_type=jnp.float32) + lvec(ROW_BO, H))
    x = layer_norm(x + attn, lvec(ROW_LN1_G, H), lvec(ROW_LN1_B, H))

    # --- FFN: matmul + GELU + matmul + residual + LN, all fused ---
    ffn = (jnp.dot(x.astype(jnp.bfloat16), w1_ref[0],
                   preferred_element_type=jnp.float32) + lvec(ROW_B1, I))
    # TODO(synk): HF BERT uses erf-GELU; tanh approximation here (small deviation).
    ffn = 0.5 * ffn * (1.0 + jnp.tanh(0.7978845608028654 *
                                      (ffn + 0.044715 * ffn * ffn * ffn)))
    ffn = (jnp.dot(ffn.astype(jnp.bfloat16), w2_ref[0],
                   preferred_element_type=jnp.float32) + lvec(ROW_B2, H))
    x = layer_norm(x + ffn, lvec(ROW_LN2_G, H), lvec(ROW_LN2_B, H))
    x_vmem[...] = x                                      # carry to next layer

    # --- last grid step: pooler + classifier + fc tail, lane-padded output ---
    @pl.when(l == pl.num_programs(0) - 1)
    def _():
        cls = x.reshape(batch, seq, H)[:, 0, :]          # [CLS] rows, no concat
        pooled = jnp.tanh(
            jnp.dot(cls.astype(jnp.bfloat16), headw_ref[0:H, 0:H],
                    preferred_element_type=jnp.float32)
            + headv_ref[ROW_POOL_B:ROW_POOL_B + 1, :H])
        logits = (jnp.dot(pooled.astype(jnp.bfloat16), headw_ref[H:2 * H, :],
                          preferred_element_type=jnp.float32)
                  + headv_ref[ROW_CLS_B:ROW_CLS_B + 1, :])
        out = (jnp.dot(logits.astype(jnp.bfloat16), headw_ref[2 * H:2 * H + PAD, :],
                       preferred_element_type=jnp.float32)
               + headv_ref[ROW_FC_B:ROW_FC_B + 1, :])
        out_ref[...] = out                               # (B, PAD) lane-dense store


# ---------------------------------------------------------------------------
# Synthetic BERT parameters (deterministic init, layer-stacked, packed operands)
# ---------------------------------------------------------------------------

def init_params(key, *, vocab=50, hidden=32, heads=4, layers=2, inter=64,
                max_pos=8, num_labels=3):
    assert num_labels == 3      # fc = nn.Linear(3, num_labels) consumes the 3-way logits
    assert hidden % heads == 0
    H, I, L = hidden, inter, layers
    Dh = H // heads
    scale = 1.0 / math.sqrt(Dh)

    keys = [key]

    def nxt():
        keys[0], sub = jax.random.split(keys[0])
        return sub

    def w(shape):
        return jax.random.normal(nxt(), shape, jnp.float32) * 0.02

    # --- encoder weights, layer-stacked; 1/sqrt(Dh) folded into Q projection ---
    wq = w((L, H, H)) * scale
    wk = w((L, H, H))
    wv = w((L, H, H))
    wqkv = jnp.stack([wq, wk, wv], axis=1).astype(jnp.bfloat16)   # (L, 3, H, H)
    wo = w((L, H, H)).astype(jnp.bfloat16)
    w1 = w((L, H, I)).astype(jnp.bfloat16)
    w2 = w((L, I, H)).astype(jnp.bfloat16)

    # --- packed per-layer vectors: biases zero, LN gammas one ---
    vec_cols = max(H, I)
    layer_vecs = jnp.zeros((L, VEC_ROWS, vec_cols), jnp.float32)
    layer_vecs = layer_vecs.at[:, ROW_LN1_G, :H].set(1.0)
    layer_vecs = layer_vecs.at[:, ROW_LN2_G, :H].set(1.0)

    # --- packed pooler / classifier / fc weights (lane-padded to PAD) ---
    pool_w = w((H, H))
    cls_w = w((H, num_labels))
    fc_w = w((num_labels, num_labels))
    head_w = jnp.zeros((2 * H + PAD, PAD), jnp.float32)
    head_w = head_w.at[0:H, 0:H].set(pool_w)
    head_w = head_w.at[H:2 * H, 0:num_labels].set(cls_w)
    head_w = head_w.at[2 * H:2 * H + num_labels, 0:num_labels].set(fc_w)
    head_w = head_w.astype(jnp.bfloat16)

    # --- packed embedding-LN / pooler / classifier / fc biases ---
    head_v = jnp.zeros((HEADV_ROWS, PAD), jnp.float32)
    head_v = head_v.at[ROW_EMB_G, :H].set(1.0)

    return dict(
        word_emb=w((vocab, H)),
        pos_emb=w((max_pos, H)),
        type_emb=w((2, H)),
        wqkv=wqkv, wo=wo, w1=w1, w2=w2,
        layer_vecs=layer_vecs,
        head_w=head_w, head_v=head_v,
    )


# ---------------------------------------------------------------------------
# Forward pass: embedding gather + mask prep in XLA glue, everything else in
# one pallas_call.
# ---------------------------------------------------------------------------

@functools.partial(jax.jit, static_argnames=("num_heads", "num_labels"))
def bert_classification_forward(params, input_ids, attention_mask, *,
                                num_heads, num_labels):
    B, S = input_ids.shape
    H = params["word_emb"].shape[1]
    L = params["wqkv"].shape[0]
    I = params["w1"].shape[2]
    vec_rows, vec_cols = params["layer_vecs"].shape[1:]
    hw_rows = params["head_w"].shape[0]

    # Embeddings (data-dependent gather stays in XLA); LN happens inside the kernel.
    emb = (params["word_emb"][input_ids]
           + params["pos_emb"][:S][None, :, :]
           + params["type_emb"][0][None, None, :]).reshape(B * S, H)

    # Additive attention mask, computed once per forward (0 keep / -1e9 pad), f32.
    mask_add = ((attention_mask.astype(jnp.float32) - 1.0) * 1e9).reshape(B, 1, S)

    kernel = functools.partial(_bert_kernel, num_heads=num_heads, batch=B, seq=S,
                               hidden=H, inter=I, eps=1e-12)

    out_pad = pl.pallas_call(
        kernel,
        out_shape=jax.ShapeDtypeStruct((B, PAD), jnp.float32),
        grid_spec=pltpu.PrefetchScalarGridSpec(
            num_scalar_prefetch=0,
            grid=(L,),
            in_specs=[
                # embeddings: raw HBM ref, DMA'd into x_vmem once at l == 0
                pl.BlockSpec(memory_space=pl.ANY),
                # constant-index operands (fetched once; at scale these would
                # additionally take pipeline_mode=pl.Buffered(1))
                pl.BlockSpec((B, 1, S), lambda l: (0, 0, 0)),          # additive mask
                # layer-indexed operands (prefetched one layer ahead by the pipeline)
                pl.BlockSpec((1, 3, H, H), lambda l: (l, 0, 0, 0)),    # q/k/v weights
                pl.BlockSpec((1, H, H), lambda l: (l, 0, 0)),          # wo
                pl.BlockSpec((1, H, I), lambda l: (l, 0, 0)),          # w1
                pl.BlockSpec((1, I, H), lambda l: (l, 0, 0)),          # w2
                pl.BlockSpec((1, vec_rows, vec_cols), lambda l: (l, 0, 0)),  # packed per-layer vecs
                # constant-index head operands
                pl.BlockSpec((hw_rows, PAD), lambda l: (0, 0)),        # pooler/cls/fc weights
                pl.BlockSpec((HEADV_ROWS, PAD), lambda l: (0, 0)),     # packed head biases/LN
            ],
            out_specs=pl.BlockSpec((B, PAD), lambda l: (0, 0)),
            scratch_shapes=[pltpu.VMEM((B * S, H), jnp.float32)],      # resident activations
        ),
        compiler_params=pltpu.CompilerParams(
            dimension_semantics=("arbitrary",),           # layers are sequentially dependent
            vmem_limit_bytes=32 * 1024 * 1024,            # above v5e's 16 MiB scoped default
        ),
    )(emb, mask_add,
      params["wqkv"], params["wo"], params["w1"], params["w2"],
      params["layer_vecs"], params["head_w"], params["head_v"])

    return out_pad[:, :num_labels]


# ---------------------------------------------------------------------------

if __name__ == "__main__":
    B, S, NUM_LABELS, HEADS = 2, 8, 3, 4
    key = jax.random.PRNGKey(0)
    kp, kid = jax.random.split(key)

    params = init_params(kp, vocab=50, hidden=32, heads=HEADS, layers=2,
                         inter=64, max_pos=S, num_labels=NUM_LABELS)

    # Deterministic "tokenized" inputs (see TODO(synk) at top of file).
    input_ids = jax.random.randint(kid, (B, S), 0, 50, dtype=jnp.int32)
    attention_mask = jnp.ones((B, S), dtype=jnp.int32).at[1, 6:].set(0)

    out = bert_classification_forward(params, input_ids, attention_mask,
                                      num_heads=HEADS, num_labels=NUM_LABELS)
    out = jax.block_until_ready(out)
    assert out.shape == (B, NUM_LABELS), out.shape
    assert bool(jnp.all(jnp.isfinite(out)))
    print("KERNEL_OK")
</pallas_src>

<mosaic_0001>
module attributes {stable_mosaic.version = 11 : i64} {
  func.func @_bert_kernel(%arg0: i32, %arg1: memref<16x32xf32, #tpu.memory_space<any>>, %arg2: memref<2x1x8xf32, #tpu.memory_space<vmem>>, %arg3: memref<1x3x32x32xbf16, #tpu.memory_space<vmem>>, %arg4: memref<1x32x32xbf16, #tpu.memory_space<vmem>>, %arg5: memref<1x32x64xbf16, #tpu.memory_space<vmem>>, %arg6: memref<1x64x32xbf16, #tpu.memory_space<vmem>>, %arg7: memref<1x16x64xf32, #tpu.memory_space<vmem>>, %arg8: memref<192x128xbf16, #tpu.memory_space<vmem>>, %arg9: memref<8x128xf32, #tpu.memory_space<vmem>>, %arg10: memref<2x128xf32, #tpu.memory_space<vmem>>, %arg11: memref<16x32xf32, #tpu.memory_space<vmem>>) attributes {dimension_semantics = [#tpu.dimension_semantics<arbitrary>], iteration_bounds = array<i64: 2>, scalar_prefetch = 0 : i64, scratch_operands = 1 : i64, tpu.core_type = #tpu.core_type<tc>, window_params = [{}, {pipeline_mode = #tpu.pipeline_mode<synchronous>, transform_indices = @transform_1, window_bounds = array<i64: 2, 1, 8>}, {transform_indices = @transform_2, window_bounds = array<i64: 1, 3, 32, 32>}, {transform_indices = @transform_3, window_bounds = array<i64: 1, 32, 32>}, {transform_indices = @transform_4, window_bounds = array<i64: 1, 32, 64>}, {transform_indices = @transform_5, window_bounds = array<i64: 1, 64, 32>}, {transform_indices = @transform_6, window_bounds = array<i64: 1, 16, 64>}, {pipeline_mode = #tpu.pipeline_mode<synchronous>, transform_indices = @transform_7, window_bounds = array<i64: 192, 128>}, {pipeline_mode = #tpu.pipeline_mode<synchronous>, transform_indices = @transform_8, window_bounds = array<i64: 8, 128>}, {pipeline_mode = #tpu.pipeline_mode<synchronous>, transform_indices = @transform_9, window_bounds = array<i64: 2, 128>}]} {
    %c0_i32 = arith.constant 0 : i32
    %0 = arith.cmpi eq, %arg0, %c0_i32 : i32
    %1 = arith.extui %0 : i1 to i32
    %c0_i32_0 = arith.constant 0 : i32
    %2 = arith.cmpi ne, %1, %c0_i32_0 : i32
    scf.if %2 {
      "tpu.region"() ({
        %279 = tpu.sem_alloc : memref<!tpu.dma_semaphore, #tpu.memory_space<semaphore_mem>>
        tpu.enqueue_dma source(%arg1 : memref<16x32xf32, #tpu.memory_space<any>>) target(%arg11 : memref<16x32xf32, #tpu.memory_space<vmem>>) target_semaphore(%279 : memref<!tpu.dma_semaphore, #tpu.memory_space<semaphore_mem>>)
        tpu.wait_dma2 semaphore(%279 : memref<!tpu.dma_semaphore, #tpu.memory_space<semaphore_mem>>) src(%arg1 : memref<16x32xf32, #tpu.memory_space<any>>) dst(%arg11 : memref<16x32xf32, #tpu.memory_space<vmem>>)
        tpu.yield
      }) : () -> ()
      %c0_98 = arith.constant 0 : index
      %c0_99 = arith.constant 0 : index
      %253 = vector.load %arg11[%c0_98, %c0_99] : memref<16x32xf32, #tpu.memory_space<vmem>>, vector<16x32xf32>
      %c0_100 = arith.constant 0 : index
      %c0_101 = arith.constant 0 : index
      %254 = vector.load %arg9[%c0_100, %c0_101] : memref<8x128xf32, #tpu.memory_space<vmem>>, vector<1x32xf32>
      %c1_102 = arith.constant 1 : index
      %c0_103 = arith.constant 0 : index
      %255 = vector.load %arg9[%c1_102, %c0_103] : memref<8x128xf32, #tpu.memory_space<vmem>>, vector<1x32xf32>
      %cst_104 = arith.constant dense<0.000000e+00> : vector<16xf32>
      %256 = vector.multi_reduction <add>, %253, %cst_104 [1] : vector<16x32xf32> to vector<16xf32>
      %257 = vector.shape_cast %256 : vector<16xf32> to vector<16x1xf32>
      %cst_105 = arith.constant 3.200000e+01 : f32
      %258 = vector.broadcast %cst_105 : f32 to vector<16x1xf32>
      %259 = arith.divf %257, %258 : vector<16x1xf32>
      %260 = vector.broadcast %259 : vector<16x1xf32> to vector<16x32xf32>
      %261 = arith.subf %253, %260 : vector<16x32xf32>
      %262 = arith.mulf %261, %261 : vector<16x32xf32>
      %cst_106 = arith.constant dense<0.000000e+00> : vector<16xf32>
      %263 = vector.multi_reduction <add>, %262, %cst_106 [1] : vector<16x32xf32> to vector<16xf32>
      %264 = vector.shape_cast %263 : vector<16xf32> to vector<16x1xf32>
      %cst_107 = arith.constant 3.200000e+01 : f32
      %265 = vector.broadcast %cst_107 : f32 to vector<16x1xf32>
      %266 = arith.divf %264, %265 : vector<16x1xf32>
      %267 = vector.broadcast %259 : vector<16x1xf32> to vector<16x32xf32>
      %268 = arith.subf %253, %267 : vector<16x32xf32>
      %cst_108 = arith.constant 9.99999996E-13 : f32
      %269 = vector.broadcast %cst_108 : f32 to vector<16x1xf32>
      %270 = arith.addf %266, %269 : vector<16x1xf32>
      %271 = math.rsqrt %270 : vector<16x1xf32>
      %272 = vector.broadcast %271 : vector<16x1xf32> to vector<16x32xf32>
      %273 = arith.mulf %268, %272 : vector<16x32xf32>
      %274 = vector.broadcast %254 : vector<1x32xf32> to vector<16x32xf32>
      %275 = arith.mulf %273, %274 : vector<16x32xf32>
      %276 = vector.broadcast %255 : vector<1x32xf32> to vector<16x32xf32>
      %277 = arith.addf %275, %276 : vector<16x32xf32>
      %c0_109 = arith.constant 0 : index
      %c0_110 = arith.constant 0 : index
      %278 = vector.load %arg11[%c0_109, %c0_110] : memref<16x32xf32, #tpu.memory_space<vmem>>, vector<16x32xf32>
      tpu.vector_store %arg11[%c0_109, %c0_110], %277 {strides = array<i32>} : memref<16x32xf32, #tpu.memory_space<vmem>>, vector<16x32xf32>,
    } else {
    }
    %c0 = arith.constant 0 : index
    %c0_1 = arith.constant 0 : index
    %3 = vector.load %arg11[%c0, %c0_1] : memref<16x32xf32, #tpu.memory_space<vmem>>, vector<16x32xf32>
    %4 = arith.truncf %3 : vector<16x32xf32> to vector<16x32xbf16>
    %c0_2 = arith.constant 0 : index
    %c0_3 = arith.constant 0 : index
    %c0_4 = arith.constant 0 : index
    %c0_5 = arith.constant 0 : index
    %5 = vector.load %arg3[%c0_2, %c0_3, %c0_4, %c0_5] : memref<1x3x32x32xbf16, #tpu.memory_space<vmem>>, vector<1x1x32x32xbf16>
    %6 = vector.shape_cast %5 : vector<1x1x32x32xbf16> to vector<32x32xbf16>
    %cst = arith.constant dense<0.000000e+00> : vector<16x32xf32>
    %7 = tpu.matmul %4, %6, %cst {dimension_numbers = #tpu.dot_dimension_numbers<[1], [0], [0], [1], [0, 0, 1, 1], [], []>} : vector<16x32xbf16>, vector<32x32xbf16>, vector<16x32xf32> -> vector<16x32xf32>
    %c0_6 = arith.constant 0 : index
    %c0_7 = arith.constant 0 : index
    %c0_8 = arith.constant 0 : index
    %8 = vector.load %arg7[%c0_6, %c0_7, %c0_8] : memref<1x16x64xf32, #tpu.memory_space<vmem>>, vector<1x1x32xf32>
    %9 = vector.shape_cast %8 : vector<1x1x32xf32> to vector<1x32xf32>
    %10 = vector.broadcast %9 : vector<1x32xf32> to vector<16x32xf32>
    %11 = arith.addf %7, %10 : vector<16x32xf32>
    %c0_9 = arith.constant 0 : index
    %c1 = arith.constant 1 : index
    %c0_10 = arith.constant 0 : index
    %c0_11 = arith.constant 0 : index
    %12 = vector.load %arg3[%c0_9, %c1, %c0_10, %c0_11] : memref<1x3x32x32xbf16, #tpu.memory_space<vmem>>, vector<1x1x32x32xbf16>
    %13 = vector.shape_cast %12 : vector<1x1x32x32xbf16> to vector<32x32xbf16>
    %cst_12 = arith.constant dense<0.000000e+00> : vector<16x32xf32>
    %14 = tpu.matmul %4, %13, %cst_12 {dimension_numbers = #tpu.dot_dimension_numbers<[1], [0], [0], [1], [0, 0, 1, 1], [], []>} : vector<16x32xbf16>, vector<32x32xbf16>, vector<16x32xf32> -> vector<16x32xf32>
    %c0_13 = arith.constant 0 : index
    %c1_14 = arith.constant 1 : index
    %c0_15 = arith.constant 0 : index
    %15 = vector.load %arg7[%c0_13, %c1_14, %c0_15] : memref<1x16x64xf32, #tpu.memory_space<vmem>>, vector<1x1x32xf32>
    %16 = vector.shape_cast %15 : vector<1x1x32xf32> to vector<1x32xf32>
    %17 = vector.broadcast %16 : vector<1x32xf32> to vector<16x32xf32>
    %18 = arith.addf %14, %17 : vector<16x32xf32>
    %c0_16 = arith.constant 0 : index
    %c2 = arith.constant 2 : index
    %c0_17 = arith.constant 0 : index
    %c0_18 = arith.constant 0 : index
    %19 = vector.load %arg3[%c0_16, %c2, %c0_17, %c0_18] : memref<1x3x32x32xbf16, #tpu.memory_space<vmem>>, vector<1x1x32x32xbf16>
    %20 = vector.shape_cast %19 : vector<1x1x32x32xbf16> to vector<32x32xbf16>
    %cst_19 = arith.constant dense<0.000000e+00> : vector<16x32xf32>
    %21 = tpu.matmul %4, %20, %cst_19 {dimension_numbers = #tpu.dot_dimension_numbers<[1], [0], [0], [1], [0, 0, 1, 1], [], []>} : vector<16x32xbf16>, vector<32x32xbf16>, vector<16x32xf32> -> vector<16x32xf32>
    %c0_20 = arith.constant 0 : index
    %c2_21 = arith.constant 2 : index
    %c0_22 = arith.constant 0 : index
    %22 = vector.load %arg7[%c0_20, %c2_21, %c0_22] : memref<1x16x64xf32, #tpu.memory_space<vmem>>, vector<1x1x32xf32>
    %23 = vector.shape_cast %22 : vector<1x1x32xf32> to vector<1x32xf32>
    %24 = vector.broadcast %23 : vector<1x32xf32> to vector<16x32xf32>
    %25 = arith.addf %21, %24 : vector<16x32xf32>
    %26 = vector.shape_cast %11 : vector<16x32xf32> to vector<2x8x32xf32>
    %27 = vector.shape_cast %18 : vector<16x32xf32> to vector<2x8x32xf32>
    %28 = vector.shape_cast %25 : vector<16x32xf32> to vector<2x8x32xf32>
    %c0_23 = arith.constant 0 : index
    %c0_24 = arith.constant 0 : index
    %c0_25 = arith.constant 0 : index
    %29 = vector.load %arg2[%c0_23, %c0_24, %c0_25] : memref<2x1x8xf32, #tpu.memory_space<vmem>>, vector<2x1x8xf32>
    %30 = arith.truncf %27 : vector<2x8x32xf32> to vector<2x8x32xbf16>
    %31 = tpu.iota {dimensions = array<i32: 2>} : vector<1x1x32xi32>
    %cst_26 = arith.constant 0.000000e+00 : f32
    %32 = vector.broadcast %cst_26 : f32 to vector<2x8x32xf32>
    %c0_i32_27 = arith.constant 0 : i32
    %33 = vector.broadcast %c0_i32_27 : i32 to vector<1x1x32xi32>
    %34 = arith.cmpi sge, %31, %33 : vector<1x1x32xi32>
    %c8_i32 = arith.constant 8 : i32
    %35 = vector.broadcast %c8_i32 : i32 to vector<1x1x32xi32>
    %36 = arith.cmpi slt, %31, %35 : vector<1x1x32xi32>
    %37 = arith.andi %34, %36 : vector<1x1x32xi1>
    %cst_28 = arith.constant 0.000000e+00 : f32
    %38 = vector.shape_cast %37 : vector<1x1x32xi1> to vector<1x1x32xi1>
    %39 = vector.broadcast %38 : vector<1x1x32xi1> to vector<2x8x32xi1>
    %40 = vector.broadcast %cst_28 : f32 to vector<2x8x32xf32>
    %41 = arith.select %39, %26, %40 : vector<2x8x32xi1>, vector<2x8x32xf32>
    %42 = arith.truncf %41 : vector<2x8x32xf32> to vector<2x8x32xbf16>
    "tpu.trace_start"() <{level = 10 : i32, message = "bqd,bkd->bqk"}> : () -> ()
    %cst_29 = arith.constant dense<0.000000e+00> : vector<2x8x8xf32>
    %43 = tpu.matmul %42, %30, %cst_29 {dimension_numbers = #tpu.dot_dimension_numbers<[2], [2], [1], [1], [0, 0, 0, 1, 1, 1], [0], [0]>} : vector<2x8x32xbf16>, vector<2x8x32xbf16>, vector<2x8x8xf32> -> vector<2x8x8xf32>
    "tpu.trace_stop"() : () -> ()
    %44 = vector.broadcast %29 : vector<2x1x8xf32> to vector<2x8x8xf32>
    %45 = arith.addf %43, %44 : vector<2x8x8xf32>
    %cst_30 = arith.constant dense<0xFF800000> : vector<2x8xf32>
    %46 = vector.multi_reduction <maximumf>, %45, %cst_30 [2] : vector<2x8x8xf32> to vector<2x8xf32>
    %47 = vector.shape_cast %46 : vector<2x8xf32> to vector<2x8x1xf32>
    %48 = vector.broadcast %47 : vector<2x8x1xf32> to vector<2x8x8xf32>
    %49 = arith.subf %45, %48 : vector<2x8x8xf32>
    %50 = math.exp %49 : vector<2x8x8xf32>
    %cst_31 = arith.constant dense<0.000000e+00> : vector<2x8xf32>
    %51 = vector.multi_reduction <add>, %50, %cst_31 [2] : vector<2x8x8xf32> to vector<2x8xf32>
    %52 = vector.shape_cast %51 : vector<2x8xf32> to vector<2x8x1xf32>
    %53 = tpu.reciprocal %52 {approx = true} : vector<2x8x1xf32> -> vector<2x8x1xf32>
    %54 = vector.broadcast %53 : vector<2x8x1xf32> to vector<2x8x8xf32>
    %55 = arith.mulf %50, %54 : vector<2x8x8xf32>
    %cst_32 = arith.constant 0.000000e+00 : f32
    %56 = vector.shape_cast %37 : vector<1x1x32xi1> to vector<1x1x32xi1>
    %57 = vector.broadcast %56 : vector<1x1x32xi1> to vector<2x8x32xi1>
    %58 = vector.broadcast %cst_32 : f32 to vector<2x8x32xf32>
    %59 = arith.select %57, %28, %58 : vector<2x8x32xi1>, vector<2x8x32xf32>
    %60 = arith.truncf %59 : vector<2x8x32xf32> to vector<2x8x32xbf16>
    %61 = arith.truncf %55 : vector<2x8x8xf32> to vector<2x8x8xbf16>
    "tpu.trace_start"() <{level = 10 : i32, message = "bqk,bkd->bqd"}> : () -> ()
    %cst_33 = arith.constant dense<0.000000e+00> : vector<2x8x32xf32>
    %62 = tpu.matmul %61, %60, %cst_33 {dimension_numbers = #tpu.dot_dimension_numbers<[2], [1], [1], [2], [0, 0, 0, 1, 1, 2], [0], [0]>} : vector<2x8x8xbf16>, vector<2x8x32xbf16>, vector<2x8x32xf32> -> vector<2x8x32xf32>
    "tpu.trace_stop"() : () -> ()
    %63 = arith.addf %32, %62 : vector<2x8x32xf32>
    %c8_i32_34 = arith.constant 8 : i32
    %64 = vector.broadcast %c8_i32_34 : i32 to vector<1x1x32xi32>
    %65 = arith.cmpi sge, %31, %64 : vector<1x1x32xi32>
    %c16_i32 = arith.constant 16 : i32
    %66 = vector.broadcast %c16_i32 : i32 to vector<1x1x32xi32>
    %67 = arith.cmpi slt, %31, %66 : vector<1x1x32xi32>
    %68 = arith.andi %65, %67 : vector<1x1x32xi1>
    %cst_35 = arith.constant 0.000000e+00 : f32
    %69 = vector.shape_cast %68 : vector<1x1x32xi1> to vector<1x1x32xi1>
    %70 = vector.broadcast %69 : vector<1x1x32xi1> to vector<2x8x32xi1>
    %71 = vector.broadcast %cst_35 : f32 to vector<2x8x32xf32>
    %72 = arith.select %70, %26, %71 : vector<2x8x32xi1>, vector<2x8x32xf32>
    %73 = arith.truncf %72 : vector<2x8x32xf32> to vector<2x8x32xbf16>
    "tpu.trace_start"() <{level = 10 : i32, message = "bqd,bkd->bqk"}> : () -> ()
    %cst_36 = arith.constant dense<0.000000e+00> : vector<2x8x8xf32>
    %74 = tpu.matmul %73, %30, %cst_36 {dimension_numbers = #tpu.dot_dimension_numbers<[2], [2], [1], [1], [0, 0, 0, 1, 1, 1], [0], [0]>} : vector<2x8x32xbf16>, vector<2x8x32xbf16>, vector<2x8x8xf32> -> vector<2x8x8xf32>
    "tpu.trace_stop"() : () -> ()
    %75 = vector.broadcast %29 : vector<2x1x8xf32> to vector<2x8x8xf32>
    %76 = arith.addf %74, %75 : vector<2x8x8xf32>
    %cst_37 = arith.constant dense<0xFF800000> : vector<2x8xf32>
    %77 = vector.multi_reduction <maximumf>, %76, %cst_37 [2] : vector<2x8x8xf32> to vector<2x8xf32>
    %78 = vector.shape_cast %77 : vector<2x8xf32> to vector<2x8x1xf32>
    %79 = vector.broadcast %78 : vector<2x8x1xf32> to vector<2x8x8xf32>
    %80 = arith.subf %76, %79 : vector<2x8x8xf32>
    %81 = math.exp %80 : vector<2x8x8xf32>
    %cst_38 = arith.constant dense<0.000000e+00> : vector<2x8xf32>
    %82 = vector.multi_reduction <add>, %81, %cst_38 [2] : vector<2x8x8xf32> to vector<2x8xf32>
    %83 = vector.shape_cast %82 : vector<2x8xf32> to vector<2x8x1xf32>
    %84 = tpu.reciprocal %83 {approx = true} : vector<2x8x1xf32> -> vector<2x8x1xf32>
    %85 = vector.broadcast %84 : vector<2x8x1xf32> to vector<2x8x8xf32>
    %86 = arith.mulf %81, %85 : vector<2x8x8xf32>
    %cst_39 = arith.constant 0.000000e+00 : f32
    %87 = vector.shape_cast %68 : vector<1x1x32xi1> to vector<1x1x32xi1>
    %88 = vector.broadcast %87 : vector<1x1x32xi1> to vector<2x8x32xi1>
    %89 = vector.broadcast %cst_39 : f32 to vector<2x8x32xf32>
    %90 = arith.select %88, %28, %89 : vector<2x8x32xi1>, vector<2x8x32xf32>
    %91 = arith.truncf %90 : vector<2x8x32xf32> to vector<2x8x32xbf16>
    %92 = arith.truncf %86 : vector<2x8x8xf32> to vector<2x8x8xbf16>
    "tpu.trace_start"() <{level = 10 : i32, message = "bqk,bkd->bqd"}> : () -> ()
    %cst_40 = arith.constant dense<0.000000e+00> : vector<2x8x32xf32>
    %93 = tpu.matmul %92, %91, %cst_40 {dimension_numbers = #tpu.dot_dimension_numbers<[2], [1], [1], [2], [0, 0, 0, 1, 1, 2], [0], [0]>} : vector<2x8x8xbf16>, vector<2x8x32xbf16>, vector<2x8x32xf32> -> vector<2x8x32xf32>
    "tpu.trace_stop"() : () -> ()
    %94 = arith.addf %63, %93 : vector<2x8x32xf32>
    %c16_i32_41 = arith.constant 16 : i32
    %95 = vector.broadcast %c16_i32_41 : i32 to vector<1x1x32xi32>
    %96 = arith.cmpi sge, %31, %95 : vector<1x1x32xi32>
    %c24_i32 = arith.constant 24 : i32
    %97 = vector.broadcast %c24_i32 : i32 to vector<1x1x32xi32>
    %98 = arith.cmpi slt, %31, %97 : vector<1x1x32xi32>
    %99 = arith.andi %96, %98 : vector<1x1x32xi1>
    %cst_42 = arith.constant 0.000000e+00 : f32
    %100 = vector.shape_cast %99 : vector<1x1x32xi1> to vector<1x1x32xi1>
    %101 = vector.broadcast %100 : vector<1x1x32xi1> to vector<2x8x32xi1>
    %102 = vector.broadcast %cst_42 : f32 to vector<2x8x32xf32>
    %103 = arith.select %101, %26, %102 : vector<2x8x32xi1>, vector<2x8x32xf32>
    %104 = arith.truncf %103 : vector<2x8x32xf32> to vector<2x8x32xbf16>
    "tpu.trace_start"() <{level = 10 : i32, message = "bqd,bkd->bqk"}> : () -> ()
    %cst_43 = arith.constant dense<0.000000e+00> : vector<2x8x8xf32>
    %105 = tpu.matmul %104, %30, %cst_43 {dimension_numbers = #tpu.dot_dimension_numbers<[2], [2], [1], [1], [0, 0, 0, 1, 1, 1], [0], [0]>} : vector<2x8x32xbf16>, vector<2x8x32xbf16>, vector<2x8x8xf32> -> vector<2x8x8xf32>
    "tpu.trace_stop"() : () -> ()
    %106 = vector.broadcast %29 : vector<2x1x8xf32> to vector<2x8x8xf32>
    %107 = arith.addf %105, %106 : vector<2x8x8xf32>
    %cst_44 = arith.constant dense<0xFF800000> : vector<2x8xf32>
    %108 = vector.multi_reduction <maximumf>, %107, %cst_44 [2] : vector<2x8x8xf32> to vector<2x8xf32>
    %109 = vector.shape_cast %108 : vector<2x8xf32> to vector<2x8x1xf32>
    %110 = vector.broadcast %109 : vector<2x8x1xf32> to vector<2x8x8xf32>
    %111 = arith.subf %107, %110 : vector<2x8x8xf32>
    %112 = math.exp %111 : vector<2x8x8xf32>
    %cst_45 = arith.constant dense<0.000000e+00> : vector<2x8xf32>
    %113 = vector.multi_reduction <add>, %112, %cst_45 [2] : vector<2x8x8xf32> to vector<2x8xf32>
    %114 = vector.shape_cast %113 : vector<2x8xf32> to vector<2x8x1xf32>
    %115 = tpu.reciprocal %114 {approx = true} : vector<2x8x1xf32> -> vector<2x8x1xf32>
    %116 = vector.broadcast %115 : vector<2x8x1xf32> to vector<2x8x8xf32>
    %117 = arith.mulf %112, %116 : vector<2x8x8xf32>
    %cst_46 = arith.constant 0.000000e+00 : f32
    %118 = vector.shape_cast %99 : vector<1x1x32xi1> to vector<1x1x32xi1>
    %119 = vector.broadcast %118 : vector<1x1x32xi1> to vector<2x8x32xi1>
    %120 = vector.broadcast %cst_46 : f32 to vector<2x8x32xf32>
    %121 = arith.select %119, %28, %120 : vector<2x8x32xi1>, vector<2x8x32xf32>
    %122 = arith.truncf %121 : vector<2x8x32xf32> to vector<2x8x32xbf16>
    %123 = arith.truncf %117 : vector<2x8x8xf32> to vector<2x8x8xbf16>
    "tpu.trace_start"() <{level = 10 : i32, message = "bqk,bkd->bqd"}> : () -> ()
    %cst_47 = arith.constant dense<0.000000e+00> : vector<2x8x32xf32>
    %124 = tpu.matmul %123, %122, %cst_47 {dimension_numbers = #tpu.dot_dimension_numbers<[2], [1], [1], [2], [0, 0, 0, 1, 1, 2], [0], [0]>} : vector<2x8x8xbf16>, vector<2x8x32xbf16>, vector<2x8x32xf32> -> vector<2x8x32xf32>
    "tpu.trace_stop"() : () -> ()
    %125 = arith.addf %94, %124 : vector<2x8x32xf32>
    %c24_i32_48 = arith.constant 24 : i32
    %126 = vector.broadcast %c24_i32_48 : i32 to vector<1x1x32xi32>
    %127 = arith.cmpi sge, %31, %126 : vector<1x1x32xi32>
    %c32_i32 = arith.constant 32 : i32
    %128 = vector.broadcast %c32_i32 : i32 to vector<1x1x32xi32>
    %129 = arith.cmpi slt, %31, %128 : vector<1x1x32xi32>
    %130 = arith.andi %127, %129 : vector<1x1x32xi1>
    %cst_49 = arith.constant 0.000000e+00 : f32
    %131 = vector.shape_cast %130 : vector<1x1x32xi1> to vector<1x1x32xi1>
    %132 = vector.broadcast %131 : vector<1x1x32xi1> to vector<2x8x32xi1>
    %133 = vector.broadcast %cst_49 : f32 to vector<2x8x32xf32>
    %134 = arith.select %132, %26, %133 : vector<2x8x32xi1>, vector<2x8x32xf32>
    %135 = arith.truncf %134 : vector<2x8x32xf32> to vector<2x8x32xbf16>
    "tpu.trace_start"() <{level = 10 : i32, message = "bqd,bkd->bqk"}> : () -> ()
    %cst_50 = arith.constant dense<0.000000e+00> : vector<2x8x8xf32>
    %136 = tpu.matmul %135, %30, %cst_50 {dimension_numbers = #tpu.dot_dimension_numbers<[2], [2], [1], [1], [0, 0, 0, 1, 1, 1], [0], [0]>} : vector<2x8x32xbf16>, vector<2x8x32xbf16>, vector<2x8x8xf32> -> vector<2x8x8xf32>
    "tpu.trace_stop"() : () -> ()
    %137 = vector.broadcast %29 : vector<2x1x8xf32> to vector<2x8x8xf32>
    %138 = arith.addf %136, %137 : vector<2x8x8xf32>
    %cst_51 = arith.constant dense<0xFF800000> : vector<2x8xf32>
    %139 = vector.multi_reduction <maximumf>, %138, %cst_51 [2] : vector<2x8x8xf32> to vector<2x8xf32>
    %140 = vector.shape_cast %139 : vector<2x8xf32> to vector<2x8x1xf32>
    %141 = vector.broadcast %140 : vector<2x8x1xf32> to vector<2x8x8xf32>
    %142 = arith.subf %138, %141 : vector<2x8x8xf32>
    %143 = math.exp %142 : vector<2x8x8xf32>
    %cst_52 = arith.constant dense<0.000000e+00> : vector<2x8xf32>
    %144 = vector.multi_reduction <add>, %143, %cst_52 [2] : vector<2x8x8xf32> to vector<2x8xf32>
    %145 = vector.shape_cast %144 : vector<2x8xf32> to vector<2x8x1xf32>
    %146 = tpu.reciprocal %145 {approx = true} : vector<2x8x1xf32> -> vector<2x8x1xf32>
    %147 = vector.broadcast %146 : vector<2x8x1xf32> to vector<2x8x8xf32>
    %148 = arith.mulf %143, %147 : vector<2x8x8xf32>
    %cst_53 = arith.constant 0.000000e+00 : f32
    %149 = vector.shape_cast %130 : vector<1x1x32xi1> to vector<1x1x32xi1>
    %150 = vector.broadcast %149 : vector<1x1x32xi1> to vector<2x8x32xi1>
    %151 = vector.broadcast %cst_53 : f32 to vector<2x8x32xf32>
    %152 = arith.select %150, %28, %151 : vector<2x8x32xi1>, vector<2x8x32xf32>
    %153 = arith.truncf %152 : vector<2x8x32xf32> to vector<2x8x32xbf16>
    %154 = arith.truncf %148 : vector<2x8x8xf32> to vector<2x8x8xbf16>
    "tpu.trace_start"() <{level = 10 : i32, message = "bqk,bkd->bqd"}> : () -> ()
    %cst_54 = arith.constant dense<0.000000e+00> : vector<2x8x32xf32>
    %155 = tpu.matmul %154, %153, %cst_54 {dimension_numbers = #tpu.dot_dimension_numbers<[2], [1], [1], [2], [0, 0, 0, 1, 1, 2], [0], [0]>} : vector<2x8x8xbf16>, vector<2x8x32xbf16>, vector<2x8x32xf32> -> vector<2x8x32xf32>
    "tpu.trace_stop"() : () -> ()
    %156 = arith.addf %125, %155 : vector<2x8x32xf32>
    %157 = vector.shape_cast %156 : vector<2x8x32xf32> to vector<16x32xf32>
    %158 = arith.truncf %157 : vector<16x32xf32> to vector<16x32xbf16>
    %c0_55 = arith.constant 0 : index
    %c0_56 = arith.constant 0 : index
    %c0_57 = arith.constant 0 : index
    %159 = vector.load %arg4[%c0_55, %c0_56, %c0_57] : memref<1x32x32xbf16, #tpu.memory_space<vmem>>, vector<1x32x32xbf16>
    %160 = vector.shape_cast %159 : vector<1x32x32xbf16> to vector<32x32xbf16>
    %cst_58 = arith.constant dense<0.000000e+00> : vector<16x32xf32>
    %161 = tpu.matmul %158, %160, %cst_58 {dimension_numbers = #tpu.dot_dimension_numbers<[1], [0], [0], [1], [0, 0, 1, 1], [], []>} : vector<16x32xbf16>, vector<32x32xbf16>, vector<16x32xf32> -> vector<16x32xf32>
    %c0_59 = arith.constant 0 : index
    %c3 = arith.constant 3 : index
    %c0_60 = arith.constant 0 : index
    %162 = vector.load %arg7[%c0_59, %c3, %c0_60] : memref<1x16x64xf32, #tpu.memory_space<vmem>>, vector<1x1x32xf32>
    %163 = vector.shape_cast %162 : vector<1x1x32xf32> to vector<1x32xf32>
    %164 = vector.broadcast %163 : vector<1x32xf32> to vector<16x32xf32>
    %165 = arith.addf %161, %164 : vector<16x32xf32>
    %166 = arith.addf %3, %165 : vector<16x32xf32>
    %c0_61 = arith.constant 0 : index
    %c4 = arith.constant 4 : index
    %c0_62 = arith.constant 0 : index
    %167 = vector.load %arg7[%c0_61, %c4, %c0_62] : memref<1x16x64xf32, #tpu.memory_space<vmem>>, vector<1x1x32xf32>
    %168 = vector.shape_cast %167 : vector<1x1x32xf32> to vector<1x32xf32>
    %c0_63 = arith.constant 0 : index
    %c5 = arith.constant 5 : index
    %c0_64 = arith.constant 0 : index
    %169 = vector.load %arg7[%c0_63, %c5, %c0_64] : memref<1x16x64xf32, #tpu.memory_space<vmem>>, vector<1x1x32xf32>
    %170 = vector.shape_cast %169 : vector<1x1x32xf32> to vector<1x32xf32>
    %cst_65 = arith.constant dense<0.000000e+00> : vector<16xf32>
    %171 = vector.multi_reduction <add>, %166, %cst_65 [1] : vector<16x32xf32> to vector<16xf32>
    %172 = vector.shape_cast %171 : vector<16xf32> to vector<16x1xf32>
    %cst_66 = arith.constant 3.200000e+01 : f32
    %173 = vector.broadcast %cst_66 : f32 to vector<16x1xf32>
    %174 = arith.divf %172, %173 : vector<16x1xf32>
    %175 = vector.broadcast %174 : vector<16x1xf32> to vector<16x32xf32>
    %176 = arith.subf %166, %175 : vector<16x32xf32>
    %177 = arith.mulf %176, %176 : vector<16x32xf32>
    %cst_67 = arith.constant dense<0.000000e+00> : vector<16xf32>
    %178 = vector.multi_reduction <add>, %177, %cst_67 [1] : vector<16x32xf32> to vector<16xf32>
    %179 = vector.shape_cast %178 : vector<16xf32> to vector<16x1xf32>
    %cst_68 = arith.constant 3.200000e+01 : f32
    %180 = vector.broadcast %cst_68 : f32 to vector<16x1xf32>
    %181 = arith.divf %179, %180 : vector<16x1xf32>
    %182 = vector.broadcast %174 : vector<16x1xf32> to vector<16x32xf32>
    %183 = arith.subf %166, %182 : vector<16x32xf32>
    %cst_69 = arith.constant 9.99999996E-13 : f32
    %184 = vector.broadcast %cst_69 : f32 to vector<16x1xf32>
    %185 = arith.addf %181, %184 : vector<16x1xf32>
    %186 = math.rsqrt %185 : vector<16x1xf32>
    %187 = vector.broadcast %186 : vector<16x1xf32> to vector<16x32xf32>
    %188 = arith.mulf %183, %187 : vector<16x32xf32>
    %189 = vector.broadcast %168 : vector<1x32xf32> to vector<16x32xf32>
    %190 = arith.mulf %188, %189 : vector<16x32xf32>
    %191 = vector.broadcast %170 : vector<1x32xf32> to vector<16x32xf32>
    %192 = arith.addf %190, %191 : vector<16x32xf32>
    %193 = arith.truncf %192 : vector<16x32xf32> to vector<16x32xbf16>
    %c0_70 = arith.constant 0 : index
    %c0_71 = arith.constant 0 : index
    %c0_72 = arith.constant 0 : index
    %194 = vector.load %arg5[%c0_70, %c0_71, %c0_72] : memref<1x32x64xbf16, #tpu.memory_space<vmem>>, vector<1x32x64xbf16>
    %195 = vector.shape_cast %194 : vector<1x32x64xbf16> to vector<32x64xbf16>
    %cst_73 = arith.constant dense<0.000000e+00> : vector<16x64xf32>
    %196 = tpu.matmul %193, %195, %cst_73 {dimension_numbers = #tpu.dot_dimension_numbers<[1], [0], [0], [1], [0, 0, 1, 1], [], []>} : vector<16x32xbf16>, vector<32x64xbf16>, vector<16x64xf32> -> vector<16x64xf32>
    %c0_74 = arith.constant 0 : index
    %c9 = arith.constant 9 : index
    %c0_75 = arith.constant 0 : index
    %197 = vector.load %arg7[%c0_74, %c9, %c0_75] : memref<1x16x64xf32, #tpu.memory_space<vmem>>, vector<1x1x64xf32>
    %198 = vector.shape_cast %197 : vector<1x1x64xf32> to vector<1x64xf32>
    %199 = vector.broadcast %198 : vector<1x64xf32> to vector<16x64xf32>
    %200 = arith.addf %196, %199 : vector<16x64xf32>
    %cst_76 = arith.constant 5.000000e-01 : f32
    %201 = vector.broadcast %cst_76 : f32 to vector<16x64xf32>
    %202 = arith.mulf %201, %200 : vector<16x64xf32>
    %cst_77 = arith.constant 4.471500e-02 : f32
    %203 = vector.broadcast %cst_77 : f32 to vector<16x64xf32>
    %204 = arith.mulf %203, %200 : vector<16x64xf32>
    %205 = arith.mulf %204, %200 : vector<16x64xf32>
    %206 = arith.mulf %205, %200 : vector<16x64xf32>
    %207 = arith.addf %200, %206 : vector<16x64xf32>
    %cst_78 = arith.constant 0.797884583 : f32
    %208 = vector.broadcast %cst_78 : f32 to vector<16x64xf32>
    %209 = arith.mulf %208, %207 : vector<16x64xf32>
    %210 = math.tanh %209 : vector<16x64xf32>
    %cst_79 = arith.constant 1.000000e+00 : f32
    %211 = vector.broadcast %cst_79 : f32 to vector<16x64xf32>
    %212 = arith.addf %211, %210 : vector<16x64xf32>
    %213 = arith.mulf %202, %212 : vector<16x64xf32>
    %214 = arith.truncf %213 : vector<16x64xf32> to vector<16x64xbf16>
    %c0_80 = arith.constant 0 : index
    %c0_81 = arith.constant 0 : index
    %c0_82 = arith.constant 0 : index
    %215 = vector.load %arg6[%c0_80, %c0_81, %c0_82] : memref<1x64x32xbf16, #tpu.memory_space<vmem>>, vector<1x64x32xbf16>
    %216 = vector.shape_cast %215 : vector<1x64x32xbf16> to vector<64x32xbf16>
    %cst_83 = arith.constant dense<0.000000e+00> : vector<16x32xf32>
    %217 = tpu.matmul %214, %216, %cst_83 {dimension_numbers = #tpu.dot_dimension_numbers<[1], [0], [0], [1], [0, 0, 1, 1], [], []>} : vector<16x64xbf16>, vector<64x32xbf16>, vector<16x32xf32> -> vector<16x32xf32>
    %c0_84 = arith.constant 0 : index
    %c6 = arith.constant 6 : index
    %c0_85 = arith.constant 0 : index
    %218 = vector.load %arg7[%c0_84, %c6, %c0_85] : memref<1x16x64xf32, #tpu.memory_space<vmem>>, vector<1x1x32xf32>
    %219 = vector.shape_cast %218 : vector<1x1x32xf32> to vector<1x32xf32>
    %220 = vector.broadcast %219 : vector<1x32xf32> to vector<16x32xf32>
    %221 = arith.addf %217, %220 : vector<16x32xf32>
    %222 = arith.addf %192, %221 : vector<16x32xf32>
    %c0_86 = arith.constant 0 : index
    %c7 = arith.constant 7 : index
    %c0_87 = arith.constant 0 : index
    %223 = vector.load %arg7[%c0_86, %c7, %c0_87] : memref<1x16x64xf32, #tpu.memory_space<vmem>>, vector<1x1x32xf32>
    %224 = vector.shape_cast %223 : vector<1x1x32xf32> to vector<1x32xf32>
    %c0_88 = arith.constant 0 : index
    %c8 = arith.constant 8 : index
    %c0_89 = arith.constant 0 : index
    %225 = vector.load %arg7[%c0_88, %c8, %c0_89] : memref<1x16x64xf32, #tpu.memory_space<vmem>>, vector<1x1x32xf32>
    %226 = vector.shape_cast %225 : vector<1x1x32xf32> to vector<1x32xf32>
    %cst_90 = arith.constant dense<0.000000e+00> : vector<16xf32>
    %227 = vector.multi_reduction <add>, %222, %cst_90 [1] : vector<16x32xf32> to vector<16xf32>
    %228 = vector.shape_cast %227 : vector<16xf32> to vector<16x1xf32>
    %cst_91 = arith.constant 3.200000e+01 : f32
    %229 = vector.broadcast %cst_91 : f32 to vector<16x1xf32>
    %230 = arith.divf %228, %229 : vector<16x1xf32>
    %231 = vector.broadcast %230 : vector<16x1xf32> to vector<16x32xf32>
    %232 = arith.subf %222, %231 : vector<16x32xf32>
    %233 = arith.mulf %232, %232 : vector<16x32xf32>
    %cst_92 = arith.constant dense<0.000000e+00> : vector<16xf32>
    %234 = vector.multi_reduction <add>, %233, %cst_92 [1] : vector<16x32xf32> to vector<16xf32>
    %235 = vector.shape_cast %234 : vector<16xf32> to vector<16x1xf32>
    %cst_93 = arith.constant 3.200000e+01 : f32
    %236 = vector.broadcast %cst_93 : f32 to vector<16x1xf32>
    %237 = arith.divf %235, %236 : vector<16x1xf32>
    %238 = vector.broadcast %230 : vector<16x1xf32> to vector<16x32xf32>
    %239 = arith.subf %222, %238 : vector<16x32xf32>
    %cst_94 = arith.constant 9.99999996E-13 : f32
    %240 = vector.broadcast %cst_94 : f32 to vector<16x1xf32>
    %241 = arith.addf %237, %240 : vector<16x1xf32>
    %242 = math.rsqrt %241 : vector<16x1xf32>
    %243 = vector.broadcast %242 : vector<16x1xf32> to vector<16x32xf32>
    %244 = arith.mulf %239, %243 : vector<16x32xf32>
    %245 = vector.broadcast %224 : vector<1x32xf32> to vector<16x32xf32>
    %246 = arith.mulf %244, %245 : vector<16x32xf32>
    %247 = vector.broadcast %226 : vector<1x32xf32> to vector<16x32xf32>
    %248 = arith.addf %246, %247 : vector<16x32xf32>
    %c0_95 = arith.constant 0 : index
    %c0_96 = arith.constant 0 : index
    %249 = vector.load %arg11[%c0_95, %c0_96] : memref<16x32xf32, #tpu.memory_space<vmem>>, vector<16x32xf32>
    tpu.vector_store %arg11[%c0_95, %c0_96], %248 {strides = array<i32>} : memref<16x32xf32, #tpu.memory_space<vmem>>, vector<16x32xf32>,
    %c1_i32 = arith.constant 1 : i32
    %250 = arith.cmpi eq, %arg0, %c1_i32 : i32
    %251 = arith.extui %250 : i1 to i32
    %c0_i32_97 = arith.constant 0 : i32
    %252 = arith.cmpi ne, %251, %c0_i32_97 : i32
    scf.if %252 {
      %253 = vector.shape_cast %248 : vector<16x32xf32> to vector<2x8x32xf32>
      %254 = vector.extract_strided_slice %253 {offsets = [0, 0, 0], sizes = [2, 1, 32], strides = [1, 1, 1]} : vector<2x8x32xf32> to vector<2x1x32xf32>
      %255 = vector.shape_cast %254 : vector<2x1x32xf32> to vector<2x32xf32>
      %256 = arith.truncf %255 : vector<2x32xf32> to vector<2x32xbf16>
      %c0_98 = arith.constant 0 : index
      %c0_99 = arith.constant 0 : index
      %257 = vector.load %arg8[%c0_98, %c0_99] : memref<192x128xbf16, #tpu.memory_space<vmem>>, vector<32x32xbf16>
      %cst_100 = arith.constant dense<0.000000e+00> : vector<2x32xf32>
      %258 = tpu.matmul %256, %257, %cst_100 {dimension_numbers = #tpu.dot_dimension_numbers<[1], [0], [0], [1], [0, 0, 1, 1], [], []>} : vector<2x32xbf16>, vector<32x32xbf16>, vector<2x32xf32> -> vector<2x32xf32>
      %c2_101 = arith.constant 2 : index
      %c0_102 = arith.constant 0 : index
      %259 = vector.load %arg9[%c2_101, %c0_102] : memref<8x128xf32, #tpu.memory_space<vmem>>, vector<1x32xf32>
      %260 = vector.broadcast %259 : vector<1x32xf32> to vector<2x32xf32>
      %261 = arith.addf %258, %260 : vector<2x32xf32>
      %262 = math.tanh %261 : vector<2x32xf32>
      %263 = arith.truncf %262 : vector<2x32xf32> to vector<2x32xbf16>
      %c32 = arith.constant 32 : index
      %c0_103 = arith.constant 0 : index
      %264 = vector.load %arg8[%c32, %c0_103] : memref<192x128xbf16, #tpu.memory_space<vmem>>, vector<32x128xbf16>
      %cst_104 = arith.constant dense<0.000000e+00> : vector<2x128xf32>
      %265 = tpu.matmul %263, %264, %cst_104 {dimension_numbers = #tpu.dot_dimension_numbers<[1], [0], [0], [1], [0, 0, 1, 1], [], []>} : vector<2x32xbf16>, vector<32x128xbf16>, vector<2x128xf32> -> vector<2x128xf32>
      %c3_105 = arith.constant 3 : index
      %c0_106 = arith.constant 0 : index
      %266 = vector.load %arg9[%c3_105, %c0_106] : memref<8x128xf32, #tpu.memory_space<vmem>>, vector<1x128xf32>
      %267 = vector.broadcast %266 : vector<1x128xf32> to vector<2x128xf32>
      %268 = arith.addf %265, %267 : vector<2x128xf32>
      %269 = arith.truncf %268 : vector<2x128xf32> to vector<2x128xbf16>
      %c64 = arith.constant 64 : index
      %c0_107 = arith.constant 0 : index
      %270 = vector.load %arg8[%c64, %c0_107] : memref<192x128xbf16, #tpu.memory_space<vmem>>, vector<128x128xbf16>
      %cst_108 = arith.constant dense<0.000000e+00> : vector<2x128xf32>
      %271 = tpu.matmul %269, %270, %cst_108 {dimension_numbers = #tpu.dot_dimension_numbers<[1], [0], [0], [1], [0, 0, 1, 1], [], []>} : vector<2x128xbf16>, vector<128x128xbf16>, vector<2x128xf32> -> vector<2x128xf32>
      %c4_109 = arith.constant 4 : index
      %c0_110 = arith.constant 0 : index
      %272 = vector.load %arg9[%c4_109, %c0_110] : memref<8x128xf32, #tpu.memory_space<vmem>>, vector<1x128xf32>
      %273 = vector.broadcast %272 : vector<1x128xf32> to vector<2x128xf32>
      %274 = arith.addf %271, %273 : vector<2x128xf32>
      %c0_111 = arith.constant 0 : index
      %c0_112 = arith.constant 0 : index
      %275 = vector.load %arg10[%c0_111, %c0_112] : memref<2x128xf32, #tpu.memory_space<vmem>>, vector<2x128xf32>
      tpu.vector_store %arg10[%c0_111, %c0_112], %274 {strides = array<i32>} : memref<2x128xf32, #tpu.memory_space<vmem>>, vector<2x128xf32>,
    } else {
    }
    return
  }
  func.func @transform_1(%arg0: i32) -> (i32, i32, i32) {
    %c0_i32 = arith.constant 0 : i32
    %c0_i32_0 = arith.constant 0 : i32
    %c0_i32_1 = arith.constant 0 : i32
    %c0_i32_2 = arith.constant 0 : i32
    return %c0_i32, %c0_i32_0, %c0_i32_1 : i32, i32, i32
  }
  func.func @transform_2(%arg0: i32) -> (i32, i32, i32, i32) {
    %c0_i32 = arith.constant 0 : i32
    %c0_i32_0 = arith.constant 0 : i32
    %c0_i32_1 = arith.constant 0 : i32
    %c0_i32_2 = arith.constant 0 : i32
    return %arg0, %c0_i32, %c0_i32_0, %c0_i32_1 : i32, i32, i32, i32
  }
  func.func @transform_3(%arg0: i32) -> (i32, i32, i32) {
    %c0_i32 = arith.constant 0 : i32
    %c0_i32_0 = arith.constant 0 : i32
    %c0_i32_1 = arith.constant 0 : i32
    return %arg0, %c0_i32, %c0_i32_0 : i32, i32, i32
  }
  func.func @transform_4(%arg0: i32) -> (i32, i32, i32) {
    %c0_i32 = arith.constant 0 : i32
    %c0_i32_0 = arith.constant 0 : i32
    %c0_i32_1 = arith.constant 0 : i32
    return %arg0, %c0_i32, %c0_i32_0 : i32, i32, i32
  }
  func.func @transform_5(%arg0: i32) -> (i32, i32, i32) {
    %c0_i32 = arith.constant 0 : i32
    %c0_i32_0 = arith.constant 0 : i32
    %c0_i32_1 = arith.constant 0 : i32
    return %arg0, %c0_i32, %c0_i32_0 : i32, i32, i32
  }
  func.func @transform_6(%arg0: i32) -> (i32, i32, i32) {
    %c0_i32 = arith.constant 0 : i32
    %c0_i32_0 = arith.constant 0 : i32
    %c0_i32_1 = arith.constant 0 : i32
    return %arg0, %c0_i32, %c0_i32_0 : i32, i32, i32
  }
  func.func @transform_7(%arg0: i32) -> (i32, i32) {
    %c0_i32 = arith.constant 0 : i32
    %c0_i32_0 = arith.constant 0 : i32
    %c0_i32_1 = arith.constant 0 : i32
    return %c0_i32, %c0_i32_0 : i32, i32
  }
  func.func @transform_8(%arg0: i32) -> (i32, i32) {
    %c0_i32 = arith.constant 0 : i32
    %c0_i32_0 = arith.constant 0 : i32
    %c0_i32_1 = arith.constant 0 : i32
    return %c0_i32, %c0_i32_0 : i32, i32
  }
  func.func @transform_9(%arg0: i32) -> (i32, i32) {
    %c0_i32 = arith.constant 0 : i32
    %c0_i32_0 = arith.constant 0 : i32
    %c0_i32_1 = arith.constant 0 : i32
    return %c0_i32, %c0_i32_0 : i32, i32
  }
}

</mosaic_0001>

<llo_original>
// kernel: bert_classification_forward.1
$region0: #{bert_classification_forward.1}
  #allocation0 [shape = 'u32[]', space=smem, size = 0x4, offset = 0x4, fixed_abs, tag = 'smem constant byte address 0x4 - core index']
  #allocation1 [shape = 'u32[144,128]{1,0:T(1,128)}', space=vmem, size = 0x12000, scoped, tag = 'internal scratch']
  #allocation2 [shape = 'f32[16,32]{1,0:T(8,128)}', space=vmem, size = 0x2000, scoped, tag = 'scratch operand']
  #allocation6 [shape = 's32[]', space=sflag, size = 0x4, offset = 0, fixed_abs, tag = 'sflag constant byte address 0x0 - dummy sync flag']
  %s0 = inlined_call_operand.vmem [shape: f32[16,32], index: 0, kind: input, shape index: {}]
  %s1 = inlined_call_operand.vmem [shape: f32[2,1,8], index: 1, kind: input, shape index: {}]
  %s2 = inlined_call_operand.vmem [shape: bf16[2,3,32,32], index: 2, kind: input, shape index: {}]
  %s3 = inlined_call_operand.vmem [shape: bf16[2,32,32], index: 3, kind: input, shape index: {}]
  %s4 = inlined_call_operand.vmem [shape: bf16[2,32,64], index: 4, kind: input, shape index: {}]
  %s5 = inlined_call_operand.vmem [shape: bf16[2,64,32], index: 5, kind: input, shape index: {}]
  %s6 = inlined_call_operand.vmem [shape: f32[2,16,64], index: 6, kind: input, shape index: {}]
  %s7 = inlined_call_operand.vmem [shape: bf16[192,128], index: 7, kind: input, shape index: {}]
  %s8 = inlined_call_operand.vmem [shape: f32[8,128], index: 8, kind: input, shape index: {}]
  %s9 = inlined_call_operand.hbm [shape: f32[2,128], index: 9, kind: output, shape index: {}]
  %s10 = sld [smem:[#allocation0]]
  $region108: #{bert_classification_forward.1} parent=0
    _
  %s12 = ssub.s32 1, %s10
  %s13 = scalar_select 0, %s12, %s10
  $region1: #{bert_classification_forward.1} parent=0
    #allocation3 [shape = 'u8[1024]{0}', space=vmem, size = 0x400, scoped, tag = 'output window, operand 0, single buffered']
    #allocation4 [shape = 's32[2]{0}', space=sflag, size = 0x8, scoped, tag = 'scoped memory for bert_classification_forward.1']
    %14 = vsyncpa [#allocation4], 0
    loop: start=0, step=1, limit=4
    $region2: #{bert_classification_forward.1} parent=1 // loop_pre_header
      _
    $region3: #{bert_classification_forward.1} parent=1 // loop_header
      %s16 = sphi 0, %s20
      %p17 = scmp.ge.s32.totalorder %s16, 4
      %s24 = sphi 0, %s24
      %s26 = sphi 0, %s24
      %s27 = sphi 0, %s26
      %s41 = sphi 0, %s27
      %s47 = sphi 0, %s49
      %s50 = sphi 0, %s47
      %s51 = sphi 0, %s50
      %s67 = sphi 0, %s51
      %s73 = sphi 0, %s75
      %s76 = sphi 0, %s73
      %s77 = sphi 0, %s76
      %s93 = sphi 0, %s77
      %s99 = sphi 0, %s101
      %s102 = sphi 0, %s99
      %s103 = sphi 0, %s102
      %s119 = sphi 0, %s103
      %s125 = sphi 0, %s127
      %s128 = sphi 0, %s125
      %s129 = sphi 0, %s128
      %s145 = sphi 0, %s129
      %s151 = sphi 0, %s153
      %s154 = sphi 0, %s151
      %s155 = sphi 0, %s154
      %s171 = sphi 0, %s155
      %s175 = sphi 0, %s175
      %s177 = sphi 0, %s175
      %s178 = sphi 0, %s177
      %s192 = sphi 0, %s178
      %s196 = sphi 0, %s196
      %s198 = sphi 0, %s196
      %s199 = sphi 0, %s198
      %s213 = sphi 0, %s199
      %s217 = sphi 0, %s217
      %s219 = sphi 0, %s217
      %s220 = sphi 0, %s219
      %s234 = sphi 0, %s220
    $region4: #{bert_classification_forward.1} parent=1 // loop_header_branch
      %19 = sbr.rel (%p17) target = $region8
    $region5: #{bert_classification_forward.1} parent=1 // loop_body
      %s21 = ssub.s32 %s16, 1
      %s22 = ssub.s32 %s16, 2
      %s23 = sadd.s32 %s16, 1
      %s25 = sadd.s32 %s24, 1
      %p28 = scmp.eq.s32.totalorder %s16, 1
      %p29 = scmp.ne.s32.totalorder %s24, %s26
      %p30 = scmp.eq.s32.totalorder %s16, 0
      %p31 = por %p29, %p30
      %p32 = scmp.ne.s32.totalorder %s24, %s26
      %p33 = scmp.eq.s32.totalorder %s21, 1
      %p34 = por %p32, %p33
      %p35 = scmp.ne.s32.totalorder %s26, %s27
      %p36 = scmp.eq.s32.totalorder %s21, 0
      %p37 = por %p35, %p36
      %p38 = scmp.ne.s32.totalorder %s26, %s27
      %p39 = scmp.eq.s32.totalorder %s22, 1
      %p40 = por %p38, %p39
      %p42 = scmp.ne.s32.totalorder %s27, %s41
      %p43 = scmp.eq.s32.totalorder %s22, 0
      %p44 = por %p42, %p43
      %s45 = ssub.s32 %s16, %s23
      %p46 = scmp.eq.s32.totalorder %s45, 0
      %s48 = sadd.s32 %s47, 1
      %s49 = scalar_select %p46, %s47, %s48
      %p52 = pneg %p46
      %p53 = scmp.eq.s32.totalorder %s16, 1
      %p54 = por %p52, %p53
      %p55 = scmp.ne.s32.totalorder %s47, %s50
      %p56 = scmp.eq.s32.totalorder %s16, 0
      %p57 = por %p55, %p56
      %p58 = scmp.ne.s32.totalorder %s47, %s50
      %p59 = scmp.eq.s32.totalorder %s21, 1
      %p60 = por %p58, %p59
      %p61 = scmp.ne.s32.totalorder %s50, %s51
      %p62 = scmp.eq.s32.totalorder %s21, 0
      %p63 = por %p61, %p62
      %p64 = scmp.ne.s32.totalorder %s50, %s51
      %p65 = scmp.eq.s32.totalorder %s22, 1
      %p66 = por %p64, %p65
      %p68 = scmp.ne.s32.totalorder %s51, %s67
      %p69 = scmp.eq.s32.totalorder %s22, 0
      %p70 = por %p68, %p69
      %s71 = ssub.s32 %s16, %s23
      %p72 = scmp.eq.s32.totalorder %s71, 0
      %s74 = sadd.s32 %s73, 1
      %s75 = scalar_select %p72, %s73, %s74
      %p78 = pneg %p72
      %p79 = scmp.eq.s32.totalorder %s16, 1
      %p80 = por %p78, %p79
      %p81 = scmp.ne.s32.totalorder %s73, %s76
      %p82 = scmp.eq.s32.totalorder %s16, 0
      %p83 = por %p81, %p82
      %p84 = scmp.ne.s32.totalorder %s73, %s76
      %p85 = scmp.eq.s32.totalorder %s21, 1
      %p86 = por %p84, %p85
      %p87 = scmp.ne.s32.totalorder %s76, %s77
      %p88 = scmp.eq.s32.totalorder %s21, 0
      %p89 = por %p87, %p88
      %p90 = scmp.ne.s32.totalorder %s76, %s77
      %p91 = scmp.eq.s32.totalorder %s22, 1
      %p92 = por %p90, %p91
      %p94 = scmp.ne.s32.totalorder %s77, %s93
      %p95 = scmp.eq.s32.totalorder %s22, 0
      %p96 = por %p94, %p95
      %s97 = ssub.s32 %s16, %s23
      %p98 = scmp.eq.s32.totalorder %s97, 0
      %s100 = sadd.s32 %s99, 1
      %s101 = scalar_select %p98, %s99, %s100
      %p104 = pneg %p98
      %p105 = scmp.eq.s32.totalorder %s16, 1
      %p106 = por %p104, %p105
      %p107 = scmp.ne.s32.totalorder %s99, %s102
      %p108 = scmp.eq.s32.totalorder %s16, 0
      %p109 = por %p107, %p108
      %p110 = scmp.ne.s32.totalorder %s99, %s102
      %p111 = scmp.eq.s32.totalorder %s21, 1
      %p112 = por %p110, %p111
      %p113 = scmp.ne.s32.totalorder %s102, %s103
      %p114 = scmp.eq.s32.totalorder %s21, 0
      %p115 = por %p113, %p114
      %p116 = scmp.ne.s32.totalorder %s102, %s103
      %p117 = scmp.eq.s32.totalorder %s22, 1
      %p118 = por %p116, %p117
      %p120 = scmp.ne.s32.totalorder %s103, %s119
      %p121 = scmp.eq.s32.totalorder %s22, 0
      %p122 = por %p120, %p121
      %s123 = ssub.s32 %s16, %s23
      %p124 = scmp.eq.s32.totalorder %s123, 0
      %s126 = sadd.s32 %s125, 1
      %s127 = scalar_select %p124, %s125, %s126
      %p130 = pneg %p124
      %p131 = scmp.eq.s32.totalorder %s16, 1
      %p132 = por %p130, %p131
      %p133 = scmp.ne.s32.totalorder %s125, %s128
      %p134 = scmp.eq.s32.totalorder %s16, 0
      %p135 = por %p133, %p134
      %p136 = scmp.ne.s32.totalorder %s125, %s128
      %p137 = scmp.eq.s32.totalorder %s21, 1
      %p138 = por %p136, %p137
      %p139 = scmp.ne.s32.totalorder %s128, %s129
      %p140 = scmp.eq.s32.totalorder %s21, 0
      %p141 = por %p139, %p140
      %p142 = scmp.ne.s32.totalorder %s128, %s129
      %p143 = scmp.eq.s32.totalorder %s22, 1
      %p144 = por %p142, %p143
      %p146 = scmp.ne.s32.totalorder %s129, %s145
      %p147 = scmp.eq.s32.totalorder %s22, 0
      %p148 = por %p146, %p147
      %s149 = ssub.s32 %s16, %s23
      %p150 = scmp.eq.s32.totalorder %s149, 0
      %s152 = sadd.s32 %s151, 1
      %s153 = scalar_select %p150, %s151, %s152
      %p156 = pneg %p150
      %p157 = scmp.eq.s32.totalorder %s16, 1
      %p158 = por %p156, %p157
      %p159 = scmp.ne.s32.totalorder %s151, %s154
      %p160 = scmp.eq.s32.totalorder %s16, 0
      %p161 = por %p159, %p160
      %p162 = scmp.ne.s32.totalorder %s151, %s154
      %p163 = scmp.eq.s32.totalorder %s21, 1
      %p164 = por %p162, %p163
      %p165 = scmp.ne.s32.totalorder %s154, %s155
      %p166 = scmp.eq.s32.totalorder %s21, 0
      %p167 = por %p165, %p166
      %p168 = scmp.ne.s32.totalorder %s154, %s155
      %p169 = scmp.eq.s32.totalorder %s22, 1
      %p170 = por %p168, %p169
      %p172 = scmp.ne.s32.totalorder %s155, %s171
      %p173 = scmp.eq.s32.totalorder %s22, 0
      %p174 = por %p172, %p173
      %s176 = sadd.s32 %s175, 1
      %p179 = scmp.eq.s32.totalorder %s16, 1
      %p180 = scmp.ne.s32.totalorder %s175, %s177
      %p181 = scmp.eq.s32.totalorder %s16, 0
      %p182 = por %p180, %p181
      %p183 = scmp.ne.s32.totalorder %s175, %s177
      %p184 = scmp.eq.s32.totalorder %s21, 1
      %p185 = por %p183, %p184
      %p186 = scmp.ne.s32.totalorder %s177, %s178
      %p187 = scmp.eq.s32.totalorder %s21, 0
      %p188 = por %p186, %p187
      %p189 = scmp.ne.s32.totalorder %s177, %s178
      %p190 = scmp.eq.s32.totalorder %s22, 1
      %p191 = por %p189, %p190
      %p193 = scmp.ne.s32.totalorder %s178, %s192
      %p194 = scmp.eq.s32.totalorder %s22, 0
      %p195 = por %p193, %p194
      %s197 = sadd.s32 %s196, 1
      %p200 = scmp.eq.s32.totalorder %s16, 1
      %p201 = scmp.ne.s32.totalorder %s196, %s198
      %p202 = scmp.eq.s32.totalorder %s16, 0
      %p203 = por %p201, %p202
      %p204 = scmp.ne.s32.totalorder %s196, %s198
      %p205 = scmp.eq.s32.totalorder %s21, 1
      %p206 = por %p204, %p205
      %p207 = scmp.ne.s32.totalorder %s198, %s199
      %p208 = scmp.eq.s32.totalorder %s21, 0
      %p209 = por %p207, %p208
      %p210 = scmp.ne.s32.totalorder %s198, %s199
      %p211 = scmp.eq.s32.totalorder %s22, 1
      %p212 = por %p210, %p211
      %p214 = scmp.ne.s32.totalorder %s199, %s213
      %p215 = scmp.eq.s32.totalorder %s22, 0
      %p216 = por %p214, %p215
      %s218 = sadd.s32 %s217, 1
      %p221 = scmp.eq.s32.totalorder %s16, 1
      %p222 = scmp.ne.s32.totalorder %s217, %s219
      %p223 = scmp.eq.s32.totalorder %s16, 0
      %p224 = por %p222, %p223
      %p225 = scmp.ne.s32.totalorder %s217, %s219
      %p226 = scmp.eq.s32.totalorder %s21, 1
      %p227 = por %p225, %p226
      %p228 = scmp.ne.s32.totalorder %s219, %s220
      %p229 = scmp.eq.s32.totalorder %s21, 0
      %p230 = por %p228, %p229
      %p231 = scmp.ne.s32.totalorder %s219, %s220
      %p232 = scmp.eq.s32.totalorder %s22, 1
      %p233 = por %p231, %p232
      %p235 = scmp.ne.s32.totalorder %s220, %s234
      %p236 = scmp.eq.s32.totalorder %s22, 0
      %p237 = por %p235, %p236
      %p238 = scmp.le.s32.totalorder 1, %s16
      %p239 = scmp.lt.s32.totalorder %s16, 3
      %p240 = pnand %p238, %p239
      %p241 = pneg %p240
      // Predicated region
      $region9: #{bert_classification_forward.1} parent=5 // pred_check
        _
      $region10: #{bert_classification_forward.1} parent=5 // pred_check_branch
        %243 = sbr.rel (%p240) target = $region12
      $region11: #{bert_classification_forward.1} parent=5 // pred_region
        %s244 = ssub.s32 %s16, 1
        // Predicated region
        $region13: #{bert_classification_forward.1} parent=11 // pred_check
          %p245 = pneg %p37
        $region14: #{bert_classification_forward.1} parent=11 // pred_check_branch
          %247 = sbr.rel (%p245) target = $region16
        $region15: #{bert_classification_forward.1} parent=11 // pred_region
          _
        $region16: #{bert_classification_forward.1} parent=11 // pred_fallthru
          _
        // Predicated region
        $region17: #{bert_classification_forward.1} parent=11 // pred_check
          %p248 = pneg %p188
        $region18: #{bert_classification_forward.1} parent=11 // pred_check_branch
          %250 = sbr.rel (%p248) target = $region20
        $region19: #{bert_classification_forward.1} parent=11 // pred_region
          _
        $region20: #{bert_classification_forward.1} parent=11 // pred_fallthru
          _
        // Predicated region
        $region21: #{bert_classification_forward.1} parent=11 // pred_check
          %p251 = pneg %p209
        $region22: #{bert_classification_forward.1} parent=11 // pred_check_branch
          %253 = sbr.rel (%p251) target = $region24
        $region23: #{bert_classification_forward.1} parent=11 // pred_region
          _
        $region24: #{bert_classification_forward.1} parent=11 // pred_fallthru
          _
      $region12: #{bert_classification_forward.1} parent=5 // pred_fallthru
        _
      %p254 = scmp.lt.s32.totalorder %s16, 2
      // Predicated region
      $region25: #{bert_classification_forward.1} parent=5 // pred_check
        %p255 = pneg %p254
      $region26: #{bert_classification_forward.1} parent=5 // pred_check_branch
        %257 = sbr.rel (%p255) target = $region28
      $region27: #{bert_classification_forward.1} parent=5 // pred_region
        // Predicated region
        $region29: #{bert_classification_forward.1} parent=27 // pred_check
          %p258 = pneg %p57
        $region30: #{bert_classification_forward.1} parent=27 // pred_check_branch
          %260 = sbr.rel (%p258) target = $region32
        $region31: #{bert_classification_forward.1} parent=27 // pred_region
          %p261 = scmp.lt.s32.totalorder %s16, 1
          %s262 = scalar_select %p261, %s16, 1
          %s263 = smul.addr %s262, 12
          %s264 = smul.addr %s263, 4
          %s265 = scalar_lea.vmem %s2, %s264
        $region32: #{bert_classification_forward.1} parent=27 // pred_fallthru
          _
        // Predicated region
        $region33: #{bert_classification_forward.1} parent=27 // pred_check
          %p266 = pneg %p83
        $region34: #{bert_classification_forward.1} parent=27 // pred_check_branch
          %268 = sbr.rel (%p266) target = $region36
        $region35: #{bert_classification_forward.1} parent=27 // pred_region
          %p269 = scmp.lt.s32.totalorder %s16, 1
          %s270 = scalar_select %p269, %s16, 1
          %s271 = smul.addr %s270, 4
          %s272 = smul.addr %s271, 4
          %s273 = scalar_lea.vmem %s3, %s272
        $region36: #{bert_classification_forward.1} parent=27 // pred_fallthru
          _
        // Predicated region
        $region37: #{bert_classification_forward.1} parent=27 // pred_check
          %p274 = pneg %p109
        $region38: #{bert_classification_forward.1} parent=27 // pred_check_branch
          %276 = sbr.rel (%p274) target = $region40
        $region39: #{bert_classification_forward.1} parent=27 // pred_region
          %p277 = scmp.lt.s32.totalorder %s16, 1
          %s278 = scalar_select %p277, %s16, 1
          %s279 = smul.addr %s278, 4
          %s280 = smul.addr %s279, 4
          %s281 = scalar_lea.vmem %s4, %s280
        $region40: #{bert_classification_forward.1} parent=27 // pred_fallthru
          _
        // Predicated region
        $region41: #{bert_classification_forward.1} parent=27 // pred_check
          %p282 = pneg %p135
        $region42: #{bert_classification_forward.1} parent=27 // pred_check_branch
          %284 = sbr.rel (%p282) target = $region44
        $region43: #{bert_classification_forward.1} parent=27 // pred_region
          %p285 = scmp.lt.s32.totalorder %s16, 1
          %s286 = scalar_select %p285, %s16, 1
          %s287 = smul.addr %s286, 8
          %s288 = smul.addr %s287, 4
          %s289 = scalar_lea.vmem %s5, %s288
        $region44: #{bert_classification_forward.1} parent=27 // pred_fallthru
          _
        // Predicated region
        $region45: #{bert_classification_forward.1} parent=27 // pred_check
          %p290 = pneg %p161
        $region46: #{bert_classification_forward.1} parent=27 // pred_check_branch
          %292 = sbr.rel (%p290) target = $region48
        $region47: #{bert_classification_forward.1} parent=27 // pred_region
          %p293 = scmp.lt.s32.totalorder %s16, 1
          %s294 = scalar_select %p293, %s16, 1
          %s295 = smul.addr %s294, 2
          %s296 = smul.addr %s295, 8
          %s297 = scalar_lea.vmem %s6, %s296
        $region48: #{bert_classification_forward.1} parent=27 // pred_fallthru
          _
      $region28: #{bert_classification_forward.1} parent=5 // pred_fallthru
        _
      %p298 = scmp.le.s32.totalorder 1, %s16
      %p299 = scmp.lt.s32.totalorder %s16, 3
      %p300 = pnand %p298, %p299
      %p301 = pneg %p300
      // Predicated region
      $region49: #{bert_classification_forward.1} parent=5 // pred_check
        _
      $region50: #{bert_classification_forward.1} parent=5 // pred_check_branch
        %303 = sbr.rel (%p300) target = $region52
      $region51: #{bert_classification_forward.1} parent=5 // pred_region
        %s304 = ssub.s32 %s16, 1
        %p305 = pneg %p37
        %p306 = pneg %p34
        %p307 = scmp.lt.s32.totalorder %s21, 1
        %s308 = scalar_select %p307, %s21, 1
        %s309 = smul.addr %s308, 12
        %s310 = smul.addr %s309, 4
        %s311 = scalar_lea.vmem %s2, %s310
        %p312 = pneg %p63
        %p313 = pneg %p60
        %p314 = scmp.lt.s32.totalorder %s21, 1
        %s315 = scalar_select %p314, %s21, 1
        %s316 = smul.addr %s315, 4
        %s317 = smul.addr %s316, 4
        %s318 = scalar_lea.vmem %s3, %s317
        %p319 = pneg %p89
        %p320 = pneg %p86
        %p321 = scmp.lt.s32.totalorder %s21, 1
        %s322 = scalar_select %p321, %s21, 1
        %s323 = smul.addr %s322, 4
        %s324 = smul.addr %s323, 4
        %s325 = scalar_lea.vmem %s4, %s324
        %p326 = pneg %p115
        %p327 = pneg %p112
        %p328 = scmp.lt.s32.totalorder %s21, 1
        %s329 = scalar_select %p328, %s21, 1
        %s330 = smul.addr %s329, 8
        %s331 = smul.addr %s330, 4
        %s332 = scalar_lea.vmem %s5, %s331
        %p333 = pneg %p141
        %p334 = pneg %p138
        %p335 = scmp.lt.s32.totalorder %s21, 1
        %s336 = scalar_select %p335, %s21, 1
        %s337 = smul.addr %s336, 2
        %s338 = smul.addr %s337, 8
        %s339 = scalar_lea.vmem %s6, %s338
        %p340 = pneg %p167
        %p341 = pneg %p164
        %p342 = pneg %p188
        %p343 = pneg %p185
        %p344 = pneg %p209
        %p345 = pneg %p206
        %p346 = pneg %p230
        %p347 = pneg %p227
        %p348 = scmp.lt.s32.totalorder %s21, 1
        %s349 = scalar_select %p348, %s21, 1
        %s350 = smul.addr %s349, 12
        %s351 = smul.addr %s350, 4
        %s352 = scalar_lea.vmem %s2, %s351
        %p353 = scmp.lt.s32.totalorder %s21, 1
        %s354 = scalar_select %p353, %s21, 1
        %s355 = smul.addr %s354, 4
        %s356 = smul.addr %s355, 4
        %s357 = scalar_lea.vmem %s3, %s356
        %p358 = scmp.lt.s32.totalorder %s21, 1
        %s359 = scalar_select %p358, %s21, 1
        %s360 = smul.addr %s359, 4
        %s361 = smul.addr %s360, 4
        %s362 = scalar_lea.vmem %s4, %s361
        %p363 = scmp.lt.s32.totalorder %s21, 1
        %s364 = scalar_select %p363, %s21, 1
        %s365 = smul.addr %s364, 8
        %s366 = smul.addr %s365, 4
        %s367 = scalar_lea.vmem %s5, %s366
        %p368 = scmp.lt.s32.totalorder %s21, 1
        %s369 = scalar_select %p368, %s21, 1
        %s370 = smul.addr %s369, 2
        %s371 = smul.addr %s370, 8
        %s372 = scalar_lea.vmem %s6, %s371
        %p374 = scmp.eq.s32.totalorder %s21, 0
        // Predicated region
        $region53: #{bert_classification_forward.1} parent=51 // pred_check
          %p375 = pneg %p374
        $region54: #{bert_classification_forward.1} parent=51 // pred_check_branch
          %377 = sbr.rel (%p375) target = $region56
        $region55: #{bert_classification_forward.1} parent=51 // pred_region
          $region57: #{bert_classification_forward.1} parent=55
            #allocation5 [shape = 's32[1]{0}', space=sflag, size = 0x4, scoped, tag = 'scoped memory for bert_classification_forward.1']
            %p379 = scmp.lt.u32.totalorder 16, 8
            %p380 = pneg %p379
            // Predicated region
            $region58: #{bert_classification_forward.1} parent=57 // pred_check
              _
            $region59: #{bert_classification_forward.1} parent=57 // pred_check_branch
              %382 = sbr.rel (%p379) target = $region61
            $region60: #{bert_classification_forward.1} parent=57 // pred_region
              %s397 = sand.u32 16, 7
              %p398 = scmp.eq.s32.totalorder %s397, 0
              // Predicated region
              $region73: #{bert_classification_forward.1} parent=60 // pred_check
                %p399 = pneg %p398
              $region74: #{bert_classification_forward.1} parent=60 // pred_check_branch
                %401 = sbr.rel (%p399) target = $region76
              $region75: #{bert_classification_forward.1} parent=60 // pred_region
                loop: start=0, step=1, limit=1
                $region77: #{bert_classification_forward.1} parent=75 // loop_pre_header
                  _
                $region78: #{bert_classification_forward.1} parent=75 // loop_header
                  %s403 = sphi 0, %s407
                  %p404 = scmp.ge.s32.totalorder %s403, 1
                  %s408 = sphi %s0, %s0
                  %s409 = sphi [#allocation2], [#allocation2]
                $region79: #{bert_classification_forward.1} parent=75 // loop_header_branch
                  %406 = sbr.rel (%p404) target = $region83
                $region80: #{bert_classification_forward.1} parent=75 // loop_body
                  %v410 = vld [vmem:[%s408] sm:$0xff]
                  %411 = vst [vmem:[%s409] sm:$0xff] %v410
                  %v412 = vld [vmem:[%s408 + $0x8] sm:$0xff]
                  %413 = vst [vmem:[%s409 + $0x8] sm:$0xff] %v412
                $region81: #{bert_classification_forward.1} parent=75 // loop_footer
                  %s407 = sadd.s32 1, %s403
                $region82: #{bert_classification_forward.1} parent=75 // loop_footer_branch
                  %402 = sbr.rel target = $region78
                $region83: #{bert_classification_forward.1} parent=75 // loop_exit
                  _
              $region76: #{bert_classification_forward.1} parent=60 // pred_fallthru
                _
              %p414 = pneg %p398
              // Predicated region
              $region84: #{bert_classification_forward.1} parent=60 // pred_check
                _
              $region85: #{bert_classification_forward.1} parent=60 // pred_check_branch
                %416 = sbr.rel (%p398) target = $region87
              $region86: #{bert_classification_forward.1} parent=60 // pred_region
                %s417 = sand.u32 16, 7
              $region87: #{bert_classification_forward.1} parent=60 // pred_fallthru
                _
            $region61: #{bert_classification_forward.1} parent=57 // pred_fallthru
              _
            // Predicated region
            $region62: #{bert_classification_forward.1} parent=57 // pred_check
              %p383 = pneg %p379
            $region63: #{bert_classification_forward.1} parent=57 // pred_check_branch
              %385 = sbr.rel (%p383) target = $region65
            $region64: #{bert_classification_forward.1} parent=57 // pred_region
              %s386 = sshllo.u32 0, 16
              loop: start=0, step=1, limit=1
              $region66: #{bert_classification_forward.1} parent=64 // loop_pre_header
                _
              $region67: #{bert_classification_forward.1} parent=64 // loop_header
                %s388 = sphi 0, %s392
                %p389 = scmp.ge.s32.totalorder %s388, 1
                %s393 = sphi %s0, %s0
                %s394 = sphi [#allocation2], [#allocation2]
              $region68: #{bert_classification_forward.1} parent=64 // loop_header_branch
                %391 = sbr.rel (%p389) target = $region72
              $region69: #{bert_classification_forward.1} parent=64 // loop_body
                %v395 = vld [vmem:[%s393] sm:%s386]
                %396 = vst [vmem:[%s394] sm:%s386] %v395
              $region70: #{bert_classification_forward.1} parent=64 // loop_footer
                %s392 = sadd.s32 1, %s388
              $region71: #{bert_classification_forward.1} parent=64 // loop_footer_branch
                %387 = sbr.rel target = $region67
              $region72: #{bert_classification_forward.1} parent=64 // loop_exit
                _
            $region65: #{bert_classification_forward.1} parent=57 // pred_fallthru
              _
            // Predicated region
            $region88: #{bert_classification_forward.1} parent=57 // pred_check
              _
            $region89: #{bert_classification_forward.1} parent=57 // pred_check_branch
              %420 = sbr.rel (0) target = $region91
            $region90: #{bert_classification_forward.1} parent=57 // pred_region
              %421 = vsyncadd [#allocation5], 256
            $region91: #{bert_classification_forward.1} parent=57 // pred_fallthru
              _
            %s422 = smul.u32 16, 1
            %s423 = sshll.u32 %s422, 4
            %424 = dma.done [#allocation5], %s423
          %v425 = vld [vmem:[#allocation2] sm:$0xff]
          %v426 = vld [vmem:[#allocation2 + $0x8] sm:$0xff]
          %v427 = vld [vmem:[%s8] sm:$0x1]
          %v428 = vld [vmem:[%s8 + $0x1] sm:$0x1]
          %vm429 = vcmask 261120
          %v430 = vsel %vm429, %v425, 0.0
          %431 = vadd.xlane.f32.xlu0 %v430
          %v432 = vpop.xlane.xlu0 %431
          %v433 = vsel %vm429, %v426, 0.0
          %434 = vadd.xlane.f32.xlu0 %v433
          %v435 = vpop.xlane.xlu0 %434
          %v436 = vrcp.pop 32.0
          %v437 = vmul.f32 %v432, %v436
          %v438 = vmul.f32 %v435, %v436
          %v439 = vsub.f32 %v425, %v437
          %v440 = vsub.f32 %v426, %v438
          %v441 = vmul.f32 %v439, %v439
          %v442 = vmul.f32 %v440, %v440
          %v443 = vsel %vm429, %v441, 0.0
          %444 = vadd.xlane.f32.xlu0 %v443
          %v445 = vpop.xlane.xlu0 %444
          %v446 = vsel %vm429, %v442, 0.0
          %447 = vadd.xlane.f32.xlu0 %v446
          %v448 = vpop.xlane.xlu0 %447
          %v449 = vmul.f32 %v445, %v436
          %v450 = vmul.f32 %v448, %v436
          %v451 = vadd.f32 %v449, 1e-12
          %v452 = vadd.f32 %v450, 1e-12
          %v453 = vrsqrt.pop %v451
          %v454 = vrsqrt.pop %v452
          %v455 = vmul.f32 %v439, %v453
          %v456 = vmul.f32 %v440, %v454
          %v457 = vlaneseq
          %v458 = vshrl.u32 %v457, 7
          %v459 = vsub.s32 0, %v458
          %v460 = vrot.slane %v427, %v459
          %v461 = vmul.f32 %v455, %v460
          %v462 = vmul.f32 %v456, %v460
          %v463 = vlaneseq
          %v464 = vshrl.u32 %v463, 7
          %v465 = vsub.s32 0, %v464
          %v466 = vrot.slane %v428, %v465
          %v467 = vadd.f32 %v461, %v466
          %v468 = vadd.f32 %v462, %v466
          %469 = vst.msk [vmem:[#allocation2] sm:$0xff] %vm429, %v467
          %470 = vst.msk [vmem:[#allocation2 + $0x8] sm:$0xff] %vm429, %v468
        $region56: #{bert_classification_forward.1} parent=51 // pred_fallthru
          _
        %v471 = vld [vmem:[#allocation2] sm:$0xff]
        %v472 = vld [vmem:[#allocation2 + $0x8] sm:$0xff]
        %v473 = vpack.c.bf16 %v472, %v471
        %v474 = vld [vmem:[%s352] sm:$0xf]
        %v475 = vld [vmem:[%s352 + $0x4] sm:$0xf]
        %v476 = vld [vmem:[%s352 + $0x8] sm:$0xf]
        %v477 = vld [vmem:[%s352 + $0xc] sm:$0xf]
        %v478 = vld [vmem:[%s372] sm:$0x1]
        %v479 = vlaneseq
        %v480 = vshrl.u32 %v479, 7
        %v481 = vsub.s32 0, %v480
        %v482 = vrot.slane %v478, %v481
        %v487 = vunpack.c.l.b16 %v474
        %v488 = vunpack.c.l.b16 %v475
        %v489 = vunpack.c.l.b16 %v476
        %v490 = vunpack.c.l.b16 %v477
        %v491 = vpack.c.b16 %v488, %v487
        %v492 = vpack.c.b16 %v490, %v489
        %vm495 = vcmask 261120
        %v497 = vsel %vm495, %v473, 0
        %499 = vmatprep.subr.bf16.mxu0 0
        %500 = vmatpush1.bf16.msra.mxu0 %v491
        %501 = vmatprep.subr.bf16.mxu0 0
        %502 = vmatpush1.bf16.msra.mxu0 %v492
        %503 = vmatprep.subr.bf16.mxu0 0
        %504 = vmatpush1.bf16.msra.mxu0 0
        %505 = vmatprep.subr.bf16.mxu0 0
        %506 = vmatpush1.bf16.msra.mxu0 0
        %507 = vmatprep.subr.bf16.mxu0 0
        %508 = vmatpush1.bf16.msra.mxu0 0
        %509 = vmatprep.subr.bf16.mxu0 0
        %510 = vmatpush1.bf16.msra.mxu0 0
        %511 = vmatprep.subr.bf16.mxu0 0
        %512 = vmatpush1.bf16.msra.mxu0 0
        %513 = vmatprep.subr.bf16.mxu0 0
        %514 = vmatpush1.bf16.msra.mxu0 0
        %515 = vmatprep.subr.bf16.mxu0 0
        %516 = vmatpush1.bf16.msra.mxu0 0
        %517 = vmatprep.subr.bf16.mxu0 0
        %518 = vmatpush1.bf16.msra.mxu0 0
        %519 = vmatprep.subr.bf16.mxu0 0
        %520 = vmatpush1.bf16.msra.mxu0 0
        %521 = vmatprep.subr.bf16.mxu0 0
        %522 = vmatpush1.bf16.msra.mxu0 0
        %523 = vmatprep.subr.bf16.mxu0 0
        %524 = vmatpush1.bf16.msra.mxu0 0
        %525 = vmatprep.subr.bf16.mxu0 0
        %526 = vmatpush1.bf16.msra.mxu0 0
        %527 = vmatprep.subr.bf16.mxu0 0
        %528 = vmatpush1.bf16.msra.mxu0 0
        %529 = vmatprep.subr.bf16.mxu0 0
        %530 = vmatpush1.bf16.msra.mxu0 0
        %531 = vmatprep.mubr.bf16.mxu0 0
        %532 = vmatmul.mubr.bf16.gmra.mrb[0].mxu0 %v497
        %v533 = vpop.f32.mrb[0].mxu0
        %v534 = vadd.f32 %v482, %v533
        %v535 = vpop.f32.mrb[0].mxu0
        %v536 = vpop.f32.mrb[0].mxu0
        %v537 = vadd.f32 %v482, %v536
        %v538 = vpop.f32.mrb[0].mxu0
        %539 = vdwg.mxu0
        %s540 = scalar_lea.vmem %s352, 16
        %v541 = vld [vmem:[%s540] sm:$0xf]
        %v542 = vld [vmem:[%s540 + $0x4] sm:$0xf]
        %v543 = vld [vmem:[%s540 + $0x8] sm:$0xf]
        %v544 = vld [vmem:[%s540 + $0xc] sm:$0xf]
        %v545 = vld [vmem:[%s372 + $0x1] sm:$0x1]
        %v546 = vlaneseq
        %v547 = vshrl.u32 %v546, 7
        %v548 = vsub.s32 0, %v547
        %v549 = vrot.slane %v545, %v548
        %v554 = vunpack.c.l.b16 %v541
        %v555 = vunpack.c.l.b16 %v542
        %v556 = vunpack.c.l.b16 %v543
        %v557 = vunpack.c.l.b16 %v544
        %v558 = vpack.c.b16 %v555, %v554
        %v559 = vpack.c.b16 %v557, %v556
        %562 = vmatprep.subr.bf16.mxu0 0
        %563 = vmatpush1.bf16.msra.mxu0 %v558
        %564 = vmatprep.subr.bf16.mxu0 0
        %565 = vmatpush1.bf16.msra.mxu0 %v559
        %566 = vmatprep.subr.bf16.mxu0 0
        %567 = vmatpush1.bf16.msra.mxu0 0
        %568 = vmatprep.subr.bf16.mxu0 0
        %569 = vmatpush1.bf16.msra.mxu0 0
        %570 = vmatprep.subr.bf16.mxu0 0
        %571 = vmatpush1.bf16.msra.mxu0 0
        %572 = vmatprep.subr.bf16.mxu0 0
        %573 = vmatpush1.bf16.msra.mxu0 0
        %574 = vmatprep.subr.bf16.mxu0 0
        %575 = vmatpush1.bf16.msra.mxu0 0
        %576 = vmatprep.subr.bf16.mxu0 0
        %577 = vmatpush1.bf16.msra.mxu0 0
        %578 = vmatprep.subr.bf16.mxu0 0
        %579 = vmatpush1.bf16.msra.mxu0 0
        %580 = vmatprep.subr.bf16.mxu0 0
        %581 = vmatpush1.bf16.msra.mxu0 0
        %582 = vmatprep.subr.bf16.mxu0 0
        %583 = vmatpush1.bf16.msra.mxu0 0
        %584 = vmatprep.subr.bf16.mxu0 0
        %585 = vmatpush1.bf16.msra.mxu0 0
        %586 = vmatprep.subr.bf16.mxu0 0
        %587 = vmatpush1.bf16.msra.mxu0 0
        %588 = vmatprep.subr.bf16.mxu0 0
        %589 = vmatpush1.bf16.msra.mxu0 0
        %590 = vmatprep.subr.bf16.mxu0 0
        %591 = vmatpush1.bf16.msra.mxu0 0
        %592 = vmatprep.subr.bf16.mxu0 0
        %593 = vmatpush1.bf16.msra.mxu0 0
        %594 = vmatprep.mubr.bf16.mxu0 0
        %595 = vmatmul.mubr.bf16.gmra.mrb[0].mxu0 %v497
        %v596 = vpop.f32.mrb[0].mxu0
        %v597 = vadd.f32 %v549, %v596
        %v598 = vpop.f32.mrb[0].mxu0
        %v599 = vpop.f32.mrb[0].mxu0
        %v600 = vadd.f32 %v549, %v599
        %v601 = vpop.f32.mrb[0].mxu0
        %602 = vdwg.mxu0
        %s603 = scalar_lea.vmem %s352, 32
        %v604 = vld [vmem:[%s603] sm:$0xf]
        %v605 = vld [vmem:[%s603 + $0x4] sm:$0xf]
        %v606 = vld [vmem:[%s603 + $0x8] sm:$0xf]
        %v607 = vld [vmem:[%s603 + $0xc] sm:$0xf]
        %v608 = vld [vmem:[%s372 + $0x2] sm:$0x1]
        %v609 = vlaneseq
        %v610 = vshrl.u32 %v609, 7
        %v611 = vsub.s32 0, %v610
        %v612 = vrot.slane %v608, %v611
        %v617 = vunpack.c.l.b16 %v604
        %v618 = vunpack.c.l.b16 %v605
        %v619 = vunpack.c.l.b16 %v606
        %v620 = vunpack.c.l.b16 %v607
        %v621 = vpack.c.b16 %v618, %v617
        %v622 = vpack.c.b16 %v620, %v619
        %625 = vmatprep.subr.bf16.mxu0 0
        %626 = vmatpush1.bf16.msra.mxu0 %v621
        %627 = vmatprep.subr.bf16.mxu0 0
        %628 = vmatpush1.bf16.msra.mxu0 %v622
        %629 = vmatprep.subr.bf16.mxu0 0
        %630 = vmatpush1.bf16.msra.mxu0 0
        %631 = vmatprep.subr.bf16.mxu0 0
        %632 = vmatpush1.bf16.msra.mxu0 0
        %633 = vmatprep.subr.bf16.mxu0 0
        %634 = vmatpush1.bf16.msra.mxu0 0
        %635 = vmatprep.subr.bf16.mxu0 0
        %636 = vmatpush1.bf16.msra.mxu0 0
        %637 = vmatprep.subr.bf16.mxu0 0
        %638 = vmatpush1.bf16.msra.mxu0 0
        %639 = vmatprep.subr.bf16.mxu0 0
        %640 = vmatpush1.bf16.msra.mxu0 0
        %641 = vmatprep.subr.bf16.mxu0 0
        %642 = vmatpush1.bf16.msra.mxu0 0
        %643 = vmatprep.subr.bf16.mxu0 0
        %644 = vmatpush1.bf16.msra.mxu0 0
        %645 = vmatprep.subr.bf16.mxu0 0
        %646 = vmatpush1.bf16.msra.mxu0 0
        %647 = vmatprep.subr.bf16.mxu0 0
        %648 = vmatpush1.bf16.msra.mxu0 0
        %649 = vmatprep.subr.bf16.mxu0 0
        %650 = vmatpush1.bf16.msra.mxu0 0
        %651 = vmatprep.subr.bf16.mxu0 0
        %652 = vmatpush1.bf16.msra.mxu0 0
        %653 = vmatprep.subr.bf16.mxu0 0
        %654 = vmatpush1.bf16.msra.mxu0 0
        %655 = vmatprep.subr.bf16.mxu0 0
        %656 = vmatpush1.bf16.msra.mxu0 0
        %657 = vmatprep.mubr.bf16.mxu0 0
        %658 = vmatmul.mubr.bf16.gmra.mrb[0].mxu0 %v497
        %v659 = vpop.f32.mrb[0].mxu0
        %v660 = vadd.f32 %v612, %v659
        %v661 = vpop.f32.mrb[0].mxu0
        %v662 = vpop.f32.mrb[0].mxu0
        %v663 = vadd.f32 %v612, %v662
        %v664 = vpop.f32.mrb[0].mxu0
        %665 = vdwg.mxu0
        %v666 = vld [vmem:[%s1] sm:$0x1]
        %v667 = vld [vmem:[%s1 + $0x1] sm:$0x1]
        %v668 = vpack.c.bf16 %v597, %v597
        %v669 = vpack.c.bf16 %v600, %v600
        %v670 = vlaneseq
        %v671 = vand.u32 %v670, 127
        %vm672 = vcmp.ge.s32.totalorder %v671, 0
        %vm673 = vcmp.lt.s32.totalorder %v671, 8
        %vm674 = vmand %vm672, %vm673
        %v675 = vsel %vm674, 1, 0
        %vm676 = vcmp.eq.s32.totalorder %v675, 1
        %v677 = vsel %vm676, %v534, 0.0
        %v678 = vsel %vm676, %v537, 0.0
        %v679 = vpack.c.bf16 %v677, %v677
        %v680 = vpack.c.bf16 %v678, %v678
        %v683 = vlaneseq
        %v684 = vshrl.u32 %v683, 7
        %v685 = vsub.s32 0, %v684
        %v686 = vrot.slane %v666, %v685
        %v687 = vlaneseq
        %v688 = vshrl.u32 %v687, 7
        %v689 = vsub.s32 0, %v688
        %v690 = vrot.slane %v667, %v689
        %v694 = vsel %vm495, %v679, 0
        %v697 = vsel %vm495, %v668, 0
        %699 = vmatprep.subr.bf16.mxu0 0
        %700 = vmatpush1.bf16.xpose.msra.mxu0 %v697
        %701 = vmatprep.subr.bf16.mxu0 0
        %702 = vmatpush1.bf16.xpose.msra.mxu0 0
        %703 = vmatprep.subr.bf16.mxu0 0
        %704 = vmatpush1.bf16.xpose.msra.mxu0 0
        %705 = vmatprep.subr.bf16.mxu0 0
        %706 = vmatpush1.bf16.xpose.msra.mxu0 0
        %707 = vmatprep.subr.bf16.mxu0 0
        %708 = vmatpush1.bf16.xpose.msra.mxu0 0
        %709 = vmatprep.subr.bf16.mxu0 0
        %710 = vmatpush1.bf16.xpose.msra.mxu0 0
        %711 = vmatprep.subr.bf16.mxu0 0
        %712 = vmatpush1.bf16.xpose.msra.mxu0 0
        %713 = vmatprep.subr.bf16.mxu0 0
        %714 = vmatpush1.bf16.xpose.msra.mxu0 0
        %715 = vmatprep.subr.bf16.mxu0 0
        %716 = vmatpush1.bf16.xpose.msra.mxu0 0
        %717 = vmatprep.subr.bf16.mxu0 0
        %718 = vmatpush1.bf16.xpose.msra.mxu0 0
        %719 = vmatprep.subr.bf16.mxu0 0
        %720 = vmatpush1.bf16.xpose.msra.mxu0 0
        %721 = vmatprep.subr.bf16.mxu0 0
        %722 = vmatpush1.bf16.xpose.msra.mxu0 0
        %723 = vmatprep.subr.bf16.mxu0 0
        %724 = vmatpush1.bf16.xpose.msra.mxu0 0
        %725 = vmatprep.subr.bf16.mxu0 0
        %726 = vmatpush1.bf16.xpose.msra.mxu0 0
        %727 = vmatprep.subr.bf16.mxu0 0
        %728 = vmatpush1.bf16.xpose.msra.mxu0 0
        %729 = vmatprep.subr.bf16.mxu0 0
        %730 = vmatpush1.bf16.xpose.msra.mxu0 0
        %731 = vmatprep.mubr.bf16.mxu0 0
        %732 = vmatmul.mubr.bf16.gmra.mrb[0].mxu0 %v694
        %v733 = vpop.f32.mrb[0].mxu0
        %v734 = vadd.f32 %v686, %v733
        %v735 = vpop.f32.mrb[0].mxu0
        %v736 = vpop.f32.mrb[0].mxu0
        %v737 = vpop.f32.mrb[0].mxu0
        %738 = vdwg.mxu0
        %v740 = vsel %vm495, %v680, 0
        %v743 = vsel %vm495, %v669, 0
        %745 = vmatprep.subr.bf16.mxu0 0
        %746 = vmatpush1.bf16.xpose.msra.mxu0 %v743
        %747 = vmatprep.subr.bf16.mxu0 0
        %748 = vmatpush1.bf16.xpose.msra.mxu0 0
        %749 = vmatprep.subr.bf16.mxu0 0
        %750 = vmatpush1.bf16.xpose.msra.mxu0 0
        %751 = vmatprep.subr.bf16.mxu0 0
        %752 = vmatpush1.bf16.xpose.msra.mxu0 0
        %753 = vmatprep.subr.bf16.mxu0 0
        %754 = vmatpush1.bf16.xpose.msra.mxu0 0
        %755 = vmatprep.subr.bf16.mxu0 0
        %756 = vmatpush1.bf16.xpose.msra.mxu0 0
        %757 = vmatprep.subr.bf16.mxu0 0
        %758 = vmatpush1.bf16.xpose.msra.mxu0 0
        %759 = vmatprep.subr.bf16.mxu0 0
        %760 = vmatpush1.bf16.xpose.msra.mxu0 0
        %761 = vmatprep.subr.bf16.mxu0 0
        %762 = vmatpush1.bf16.xpose.msra.mxu0 0
        %763 = vmatprep.subr.bf16.mxu0 0
        %764 = vmatpush1.bf16.xpose.msra.mxu0 0
        %765 = vmatprep.subr.bf16.mxu0 0
        %766 = vmatpush1.bf16.xpose.msra.mxu0 0
        %767 = vmatprep.subr.bf16.mxu0 0
        %768 = vmatpush1.bf16.xpose.msra.mxu0 0
        %769 = vmatprep.subr.bf16.mxu0 0
        %770 = vmatpush1.bf16.xpose.msra.mxu0 0
        %771 = vmatprep.subr.bf16.mxu0 0
        %772 = vmatpush1.bf16.xpose.msra.mxu0 0
        %773 = vmatprep.subr.bf16.mxu0 0
        %774 = vmatpush1.bf16.xpose.msra.mxu0 0
        %775 = vmatprep.subr.bf16.mxu0 0
        %776 = vmatpush1.bf16.xpose.msra.mxu0 0
        %777 = vmatprep.mubr.bf16.mxu0 0
        %778 = vmatmul.mubr.bf16.gmra.mrb[0].mxu0 %v740
        %v779 = vpop.f32.mrb[0].mxu0
        %v780 = vadd.f32 %v690, %v779
        %v781 = vpop.f32.mrb[0].mxu0
        %v782 = vpop.f32.mrb[0].mxu0
        %v783 = vpop.f32.mrb[0].mxu0
        %784 = vdwg.mxu0
        %vm785 = vcmask 64512
        %v786 = vsel %vm785, %v734, -inf
        %787 = vmax.xlane.f32.xlu0 %v786
        %v788 = vpop.xlane.xlu0 %787
        %v789 = vsel %vm785, %v780, -inf
        %790 = vmax.xlane.f32.xlu0 %v789
        %v791 = vpop.xlane.xlu0 %790
        %v792 = vsub.f32 %v734, %v788
        %v793 = vsub.f32 %v780, %v791
        %v794 = vmul.f32 %v792, 1.442695
        %v795 = vpow.pop %v794
        %v796 = vmul.f32 %v793, 1.442695
        %v797 = vpow.pop %v796
        %v798 = vsel %vm785, %v795, 0.0
        %799 = vadd.xlane.f32.xlu0 %v798
        %v800 = vpop.xlane.xlu0 %799
        %v801 = vsel %vm785, %v797, 0.0
        %802 = vadd.xlane.f32.xlu0 %v801
        %v803 = vpop.xlane.xlu0 %802
        %v804 = vrcp.pop %v800
        %v805 = vrcp.pop %v803
        %v806 = vmul.f32 %v795, %v804
        %v807 = vmul.f32 %v797, %v805
        %v808 = vsel %vm676, %v660, 0.0
        %v809 = vsel %vm676, %v663, 0.0
        %v810 = vpack.c.bf16 %v808, %v808
        %v811 = vpack.c.bf16 %v809, %v809
        %v812 = vpack.c.bf16 %v806, %v806
        %v813 = vpack.c.bf16 %v807, %v807
        %vm814 = vcmp.ge.s32.totalorder %v671, 8
        %vm815 = vcmp.lt.s32.totalorder %v671, 16
        %vm816 = vmand %vm814, %vm815
        %v817 = vsel %vm816, 1, 0
        %vm818 = vcmp.eq.s32.totalorder %v817, 1
        %v819 = vsel %vm818, %v534, 0.0
        %v820 = vsel %vm818, %v537, 0.0
        %v821 = vpack.c.bf16 %v819, %v819
        %v822 = vpack.c.bf16 %v820, %v820
        %v824 = vsel %vm495, %v821, 0
        %826 = vmatprep.subr.bf16.mxu0 0
        %827 = vmatpush1.bf16.xpose.msra.mxu0 %v697
        %828 = vmatprep.subr.bf16.mxu0 0
        %829 = vmatpush1.bf16.xpose.msra.mxu0 0
        %830 = vmatprep.subr.bf16.mxu0 0
        %831 = vmatpush1.bf16.xpose.msra.mxu0 0
        %832 = vmatprep.subr.bf16.mxu0 0
        %833 = vmatpush1.bf16.xpose.msra.mxu0 0
        %834 = vmatprep.subr.bf16.mxu0 0
        %835 = vmatpush1.bf16.xpose.msra.mxu0 0
        %836 = vmatprep.subr.bf16.mxu0 0
        %837 = vmatpush1.bf16.xpose.msra.mxu0 0
        %838 = vmatprep.subr.bf16.mxu0 0
        %839 = vmatpush1.bf16.xpose.msra.mxu0 0
        %840 = vmatprep.subr.bf16.mxu0 0
        %841 = vmatpush1.bf16.xpose.msra.mxu0 0
        %842 = vmatprep.subr.bf16.mxu0 0
        %843 = vmatpush1.bf16.xpose.msra.mxu0 0
        %844 = vmatprep.subr.bf16.mxu0 0
        %845 = vmatpush1.bf16.xpose.msra.mxu0 0
        %846 = vmatprep.subr.bf16.mxu0 0
        %847 = vmatpush1.bf16.xpose.msra.mxu0 0
        %848 = vmatprep.subr.bf16.mxu0 0
        %849 = vmatpush1.bf16.xpose.msra.mxu0 0
        %850 = vmatprep.subr.bf16.mxu0 0
        %851 = vmatpush1.bf16.xpose.msra.mxu0 0
        %852 = vmatprep.subr.bf16.mxu0 0
        %853 = vmatpush1.bf16.xpose.msra.mxu0 0
        %854 = vmatprep.subr.bf16.mxu0 0
        %855 = vmatpush1.bf16.xpose.msra.mxu0 0
        %856 = vmatprep.subr.bf16.mxu0 0
        %857 = vmatpush1.bf16.xpose.msra.mxu0 0
        %858 = vmatprep.mubr.bf16.mxu0 0
        %859 = vmatmul.mubr.bf16.gmra.mrb[0].mxu0 %v824
        %v860 = vpop.f32.mrb[0].mxu0
        %v861 = vadd.f32 %v686, %v860
        %v862 = vpop.f32.mrb[0].mxu0
        %v863 = vpop.f32.mrb[0].mxu0
        %v864 = vpop.f32.mrb[0].mxu0
        %865 = vdwg.mxu0
        %v867 = vsel %vm495, %v822, 0
        %869 = vmatprep.subr.bf16.mxu0 0
        %870 = vmatpush1.bf16.xpose.msra.mxu0 %v743
        %871 = vmatprep.subr.bf16.mxu0 0
        %872 = vmatpush1.bf16.xpose.msra.mxu0 0
        %873 = vmatprep.subr.bf16.mxu0 0
        %874 = vmatpush1.bf16.xpose.msra.mxu0 0
        %875 = vmatprep.subr.bf16.mxu0 0
        %876 = vmatpush1.bf16.xpose.msra.mxu0 0
        %877 = vmatprep.subr.bf16.mxu0 0
        %878 = vmatpush1.bf16.xpose.msra.mxu0 0
        %879 = vmatprep.subr.bf16.mxu0 0
        %880 = vmatpush1.bf16.xpose.msra.mxu0 0
        %881 = vmatprep.subr.bf16.mxu0 0
        %882 = vmatpush1.bf16.xpose.msra.mxu0 0
        %883 = vmatprep.subr.bf16.mxu0 0
        %884 = vmatpush1.bf16.xpose.msra.mxu0 0
        %885 = vmatprep.subr.bf16.mxu0 0
        %886 = vmatpush1.bf16.xpose.msra.mxu0 0
        %887 = vmatprep.subr.bf16.mxu0 0
        %888 = vmatpush1.bf16.xpose.msra.mxu0 0
        %889 = vmatprep.subr.bf16.mxu0 0
        %890 = vmatpush1.bf16.xpose.msra.mxu0 0
        %891 = vmatprep.subr.bf16.mxu0 0
        %892 = vmatpush1.bf16.xpose.msra.mxu0 0
        %893 = vmatprep.subr.bf16.mxu0 0
        %894 = vmatpush1.bf16.xpose.msra.mxu0 0
        %895 = vmatprep.subr.bf16.mxu0 0
        %896 = vmatpush1.bf16.xpose.msra.mxu0 0
        %897 = vmatprep.subr.bf16.mxu0 0
        %898 = vmatpush1.bf16.xpose.msra.mxu0 0
        %899 = vmatprep.subr.bf16.mxu0 0
        %900 = vmatpush1.bf16.xpose.msra.mxu0 0
        %901 = vmatprep.mubr.bf16.mxu0 0
        %902 = vmatmul.mubr.bf16.gmra.mrb[0].mxu0 %v867
        %v903 = vpop.f32.mrb[0].mxu0
        %v904 = vadd.f32 %v690, %v903
        %v905 = vpop.f32.mrb[0].mxu0
        %v906 = vpop.f32.mrb[0].mxu0
        %v907 = vpop.f32.mrb[0].mxu0
        %908 = vdwg.mxu0
        %v909 = vsel %vm785, %v861, -inf
        %910 = vmax.xlane.f32.xlu0 %v909
        %v911 = vpop.xlane.xlu0 %910
        %v912 = vsel %vm785, %v904, -inf
        %913 = vmax.xlane.f32.xlu0 %v912
        %v914 = vpop.xlane.xlu0 %913
        %v915 = vsub.f32 %v861, %v911
        %v916 = vsub.f32 %v904, %v914
        %v917 = vmul.f32 %v915, 1.442695
        %v918 = vpow.pop %v917
        %v919 = vmul.f32 %v916, 1.442695
        %v920 = vpow.pop %v919
        %v921 = vsel %vm785, %v918, 0.0
        %922 = vadd.xlane.f32.xlu0 %v921
        %v923 = vpop.xlane.xlu0 %922
        %v924 = vsel %vm785, %v920, 0.0
        %925 = vadd.xlane.f32.xlu0 %v924
        %v926 = vpop.xlane.xlu0 %925
        %v927 = vrcp.pop %v923
        %v928 = vrcp.pop %v926
        %v929 = vmul.f32 %v918, %v927
        %v930 = vmul.f32 %v920, %v928
        %v931 = vsel %vm818, %v660, 0.0
        %v932 = vsel %vm818, %v663, 0.0
        %v933 = vpack.c.bf16 %v931, %v931
        %v934 = vpack.c.bf16 %v932, %v932
        %v935 = vpack.c.bf16 %v929, %v929
        %v936 = vpack.c.bf16 %v930, %v930
        %v938 = vsel %vm785, %v935, 0
        %vm940 = vcmask 1043456
        %v942 = vsel %vm940, %v933, 0
        %944 = vmatprep.subr.bf16.mxu0 0
        %945 = vmatpush1.bf16.msra.mxu0 %v942
        %946 = vmatprep.subr.bf16.mxu0 0
        %947 = vmatpush1.bf16.msra.mxu0 0
        %948 = vmatprep.subr.bf16.mxu0 0
        %949 = vmatpush1.bf16.msra.mxu0 0
        %950 = vmatprep.subr.bf16.mxu0 0
        %951 = vmatpush1.bf16.msra.mxu0 0
        %952 = vmatprep.subr.bf16.mxu0 0
        %953 = vmatpush1.bf16.msra.mxu0 0
        %954 = vmatprep.subr.bf16.mxu0 0
        %955 = vmatpush1.bf16.msra.mxu0 0
        %956 = vmatprep.subr.bf16.mxu0 0
        %957 = vmatpush1.bf16.msra.mxu0 0
        %958 = vmatprep.subr.bf16.mxu0 0
        %959 = vmatpush1.bf16.msra.mxu0 0
        %960 = vmatprep.subr.bf16.mxu0 0
        %961 = vmatpush1.bf16.msra.mxu0 0
        %962 = vmatprep.subr.bf16.mxu0 0
        %963 = vmatpush1.bf16.msra.mxu0 0
        %964 = vmatprep.subr.bf16.mxu0 0
        %965 = vmatpush1.bf16.msra.mxu0 0
        %966 = vmatprep.subr.bf16.mxu0 0
        %967 = vmatpush1.bf16.msra.mxu0 0
        %968 = vmatprep.subr.bf16.mxu0 0
        %969 = vmatpush1.bf16.msra.mxu0 0
        %970 = vmatprep.subr.bf16.mxu0 0
        %971 = vmatpush1.bf16.msra.mxu0 0
        %972 = vmatprep.subr.bf16.mxu0 0
        %973 = vmatpush1.bf16.msra.mxu0 0
        %974 = vmatprep.subr.bf16.mxu0 0
        %975 = vmatpush1.bf16.msra.mxu0 0
        %976 = vmatprep.mubr.bf16.mxu0 0
        %977 = vmatmul.mubr.bf16.gmra.mrb[0].mxu0 %v938
        %v978 = vpop.f32.mrb[0].mxu0
        %v979 = vadd.f32 0.0, %v978
        %v980 = vpop.f32.mrb[0].mxu0
        %v981 = vpop.f32.mrb[0].mxu0
        %v982 = vpop.f32.mrb[0].mxu0
        %983 = vdwg.mxu0
        %v985 = vsel %vm785, %v936, 0
        %v988 = vsel %vm940, %v934, 0
        %990 = vmatprep.subr.bf16.mxu0 0
        %991 = vmatpush1.bf16.msra.mxu0 %v988
        %992 = vmatprep.subr.bf16.mxu0 0
        %993 = vmatpush1.bf16.msra.mxu0 0
        %994 = vmatprep.subr.bf16.mxu0 0
        %995 = vmatpush1.bf16.msra.mxu0 0
        %996 = vmatprep.subr.bf16.mxu0 0
        %997 = vmatpush1.bf16.msra.mxu0 0
        %998 = vmatprep.subr.bf16.mxu0 0
        %999 = vmatpush1.bf16.msra.mxu0 0
        %1000 = vmatprep.subr.bf16.mxu0 0
        %1001 = vmatpush1.bf16.msra.mxu0 0
        %1002 = vmatprep.subr.bf16.mxu0 0
        %1003 = vmatpush1.bf16.msra.mxu0 0
        %1004 = vmatprep.subr.bf16.mxu0 0
        %1005 = vmatpush1.bf16.msra.mxu0 0
        %1006 = vmatprep.subr.bf16.mxu0 0
        %1007 = vmatpush1.bf16.msra.mxu0 0
        %1008 = vmatprep.subr.bf16.mxu0 0
        %1009 = vmatpush1.bf16.msra.mxu0 0
        %1010 = vmatprep.subr.bf16.mxu0 0
        %1011 = vmatpush1.bf16.msra.mxu0 0
        %1012 = vmatprep.subr.bf16.mxu0 0
        %1013 = vmatpush1.bf16.msra.mxu0 0
        %1014 = vmatprep.subr.bf16.mxu0 0
        %1015 = vmatpush1.bf16.msra.mxu0 0
        %1016 = vmatprep.subr.bf16.mxu0 0
        %1017 = vmatpush1.bf16.msra.mxu0 0
        %1018 = vmatprep.subr.bf16.mxu0 0
        %1019 = vmatpush1.bf16.msra.mxu0 0
        %1020 = vmatprep.subr.bf16.mxu0 0
        %1021 = vmatpush1.bf16.msra.mxu0 0
        %1022 = vmatprep.mubr.bf16.mxu0 0
        %1023 = vmatmul.mubr.bf16.gmra.mrb[0].mxu0 %v985
        %v1024 = vpop.f32.mrb[0].mxu0
        %v1025 = vadd.f32 0.0, %v1024
        %v1026 = vpop.f32.mrb[0].mxu0
        %v1027 = vpop.f32.mrb[0].mxu0
        %v1028 = vpop.f32.mrb[0].mxu0
        %1029 = vdwg.mxu0
        %v1031 = vsel %vm785, %v812, 0
        %v1034 = vsel %vm940, %v810, 0
        %1036 = vmatprep.subr.bf16.mxu0 0
        %1037 = vmatpush1.bf16.msra.mxu0 %v1034
        %1038 = vmatprep.subr.bf16.mxu0 0
        %1039 = vmatpush1.bf16.msra.mxu0 0
        %1040 = vmatprep.subr.bf16.mxu0 0
        %1041 = vmatpush1.bf16.msra.mxu0 0
        %1042 = vmatprep.subr.bf16.mxu0 0
        %1043 = vmatpush1.bf16.msra.mxu0 0
        %1044 = vmatprep.subr.bf16.mxu0 0
        %1045 = vmatpush1.bf16.msra.mxu0 0
        %1046 = vmatprep.subr.bf16.mxu0 0
        %1047 = vmatpush1.bf16.msra.mxu0 0
        %1048 = vmatprep.subr.bf16.mxu0 0
        %1049 = vmatpush1.bf16.msra.mxu0 0
        %1050 = vmatprep.subr.bf16.mxu0 0
        %1051 = vmatpush1.bf16.msra.mxu0 0
        %1052 = vmatprep.subr.bf16.mxu0 0
        %1053 = vmatpush1.bf16.msra.mxu0 0
        %1054 = vmatprep.subr.bf16.mxu0 0
        %1055 = vmatpush1.bf16.msra.mxu0 0
        %1056 = vmatprep.subr.bf16.mxu0 0
        %1057 = vmatpush1.bf16.msra.mxu0 0
        %1058 = vmatprep.subr.bf16.mxu0 0
        %1059 = vmatpush1.bf16.msra.mxu0 0
        %1060 = vmatprep.subr.bf16.mxu0 0
        %1061 = vmatpush1.bf16.msra.mxu0 0
        %1062 = vmatprep.subr.bf16.mxu0 0
        %1063 = vmatpush1.bf16.msra.mxu0 0
        %1064 = vmatprep.subr.bf16.mxu0 0
        %1065 = vmatpush1.bf16.msra.mxu0 0
        %1066 = vmatprep.subr.bf16.mxu0 0
        %1067 = vmatpush1.bf16.msra.mxu0 0
        %1068 = vmatprep.mubr.bf16.mxu0 0
        %1069 = vmatmul.mubr.bf16.gmra.mrb[0].mxu0 %v1031
        %v1070 = vpop.f32.mrb[0].mxu0
        %v1071 = vadd.f32 %v979, %v1070
        %v1072 = vpop.f32.mrb[0].mxu0
        %v1073 = vpop.f32.mrb[0].mxu0
        %v1074 = vpop.f32.mrb[0].mxu0
        %1075 = vdwg.mxu0
        %v1077 = vsel %vm785, %v813, 0
        %v1080 = vsel %vm940, %v811, 0
        %1082 = vmatprep.subr.bf16.mxu0 0
        %1083 = vmatpush1.bf16.msra.mxu0 %v1080
        %1084 = vmatprep.subr.bf16.mxu0 0
        %1085 = vmatpush1.bf16.msra.mxu0 0
        %1086 = vmatprep.subr.bf16.mxu0 0
        %1087 = vmatpush1.bf16.msra.mxu0 0
        %1088 = vmatprep.subr.bf16.mxu0 0
        %1089 = vmatpush1.bf16.msra.mxu0 0
        %1090 = vmatprep.subr.bf16.mxu0 0
        %1091 = vmatpush1.bf16.msra.mxu0 0
        %1092 = vmatprep.subr.bf16.mxu0 0
        %1093 = vmatpush1.bf16.msra.mxu0 0
        %1094 = vmatprep.subr.bf16.mxu0 0
        %1095 = vmatpush1.bf16.msra.mxu0 0
        %1096 = vmatprep.subr.bf16.mxu0 0
        %1097 = vmatpush1.bf16.msra.mxu0 0
        %1098 = vmatprep.subr.bf16.mxu0 0
        %1099 = vmatpush1.bf16.msra.mxu0 0
        %1100 = vmatprep.subr.bf16.mxu0 0
        %1101 = vmatpush1.bf16.msra.mxu0 0
        %1102 = vmatprep.subr.bf16.mxu0 0
        %1103 = vmatpush1.bf16.msra.mxu0 0
        %1104 = vmatprep.subr.bf16.mxu0 0
        %1105 = vmatpush1.bf16.msra.mxu0 0
        %1106 = vmatprep.subr.bf16.mxu0 0
        %1107 = vmatpush1.bf16.msra.mxu0 0
        %1108 = vmatprep.subr.bf16.mxu0 0
        %1109 = vmatpush1.bf16.msra.mxu0 0
        %1110 = vmatprep.subr.bf16.mxu0 0
        %1111 = vmatpush1.bf16.msra.mxu0 0
        %1112 = vmatprep.subr.bf16.mxu0 0
        %1113 = vmatpush1.bf16.msra.mxu0 0
        %1114 = vmatprep.mubr.bf16.mxu0 0
        %1115 = vmatmul.mubr.bf16.gmra.mrb[0].mxu0 %v1077
        %v1116 = vpop.f32.mrb[0].mxu0
        %v1117 = vadd.f32 %v1025, %v1116
        %v1118 = vpop.f32.mrb[0].mxu0
        %v1119 = vpop.f32.mrb[0].mxu0
        %v1120 = vpop.f32.mrb[0].mxu0
        %1121 = vdwg.mxu0
        %vm1122 = vcmp.ge.s32.totalorder %v671, 16
        %vm1123 = vcmp.lt.s32.totalorder %v671, 24
        %vm1124 = vmand %vm1122, %vm1123
        %v1125 = vsel %vm1124, 1, 0
        %vm1126 = vcmp.eq.s32.totalorder %v1125, 1
        %v1127 = vsel %vm1126, %v534, 0.0
        %v1128 = vsel %vm1126, %v537, 0.0
        %v1129 = vpack.c.bf16 %v1127, %v1127
        %v1130 = vpack.c.bf16 %v1128, %v1128
        %v1132 = vsel %vm495, %v1129, 0
        %1134 = vmatprep.subr.bf16.mxu0 0
        %1135 = vmatpush1.bf16.xpose.msra.mxu0 %v697
        %1136 = vmatprep.subr.bf16.mxu0 0
        %1137 = vmatpush1.bf16.xpose.msra.mxu0 0
        %1138 = vmatprep.subr.bf16.mxu0 0
        %1139 = vmatpush1.bf16.xpose.msra.mxu0 0
        %1140 = vmatprep.subr.bf16.mxu0 0
        %1141 = vmatpush1.bf16.xpose.msra.mxu0 0
        %1142 = vmatprep.subr.bf16.mxu0 0
        %1143 = vmatpush1.bf16.xpose.msra.mxu0 0
        %1144 = vmatprep.subr.bf16.mxu0 0
        %1145 = vmatpush1.bf16.xpose.msra.mxu0 0
        %1146 = vmatprep.subr.bf16.mxu0 0
        %1147 = vmatpush1.bf16.xpose.msra.mxu0 0
        %1148 = vmatprep.subr.bf16.mxu0 0
        %1149 = vmatpush1.bf16.xpose.msra.mxu0 0
        %1150 = vmatprep.subr.bf16.mxu0 0
        %1151 = vmatpush1.bf16.xpose.msra.mxu0 0
        %1152 = vmatprep.subr.bf16.mxu0 0
        %1153 = vmatpush1.bf16.xpose.msra.mxu0 0
        %1154 = vmatprep.subr.bf16.mxu0 0
        %1155 = vmatpush1.bf16.xpose.msra.mxu0 0
        %1156 = vmatprep.subr.bf16.mxu0 0
        %1157 = vmatpush1.bf16.xpose.msra.mxu0 0
        %1158 = vmatprep.subr.bf16.mxu0 0
        %1159 = vmatpush1.bf16.xpose.msra.mxu0 0
        %1160 = vmatprep.subr.bf16.mxu0 0
        %1161 = vmatpush1.bf16.xpose.msra.mxu0 0
        %1162 = vmatprep.subr.bf16.mxu0 0
        %1163 = vmatpush1.bf16.xpose.msra.mxu0 0
        %1164 = vmatprep.subr.bf16.mxu0 0
        %1165 = vmatpush1.bf16.xpose.msra.mxu0 0
        %1166 = vmatprep.mubr.bf16.mxu0 0
        %1167 = vmatmul.mubr.bf16.gmra.mrb[0].mxu0 %v1132
        %v1168 = vpop.f32.mrb[0].mxu0
        %v1169 = vadd.f32 %v686, %v1168
        %v1170 = vpop.f32.mrb[0].mxu0
        %v1171 = vpop.f32.mrb[0].mxu0
        %v1172 = vpop.f32.mrb[0].mxu0
        %1173 = vdwg.mxu0
        %v1175 = vsel %vm495, %v1130, 0
        %1177 = vmatprep.subr.bf16.mxu0 0
        %1178 = vmatpush1.bf16.xpose.msra.mxu0 %v743
        %1179 = vmatprep.subr.bf16.mxu0 0
        %1180 = vmatpush1.bf16.xpose.msra.mxu0 0
        %1181 = vmatprep.subr.bf16.mxu0 0
        %1182 = vmatpush1.bf16.xpose.msra.mxu0 0
        %1183 = vmatprep.subr.bf16.mxu0 0
        %1184 = vmatpush1.bf16.xpose.msra.mxu0 0
        %1185 = vmatprep.subr.bf16.mxu0 0
        %1186 = vmatpush1.bf16.xpose.msra.mxu0 0
        %1187 = vmatprep.subr.bf16.mxu0 0
        %1188 = vmatpush1.bf16.xpose.msra.mxu0 0
        %1189 = vmatprep.subr.bf16.mxu0 0
        %1190 = vmatpush1.bf16.xpose.msra.mxu0 0
        %1191 = vmatprep.subr.bf16.mxu0 0
        %1192 = vmatpush1.bf16.xpose.msra.mxu0 0
        %1193 = vmatprep.subr.bf16.mxu0 0
        %1194 = vmatpush1.bf16.xpose.msra.mxu0 0
        %1195 = vmatprep.subr.bf16.mxu0 0
        %1196 = vmatpush1.bf16.xpose.msra.mxu0 0
        %1197 = vmatprep.subr.bf16.mxu0 0
        %1198 = vmatpush1.bf16.xpose.msra.mxu0 0
        %1199 = vmatprep.subr.bf16.mxu0 0
        %1200 = vmatpush1.bf16.xpose.msra.mxu0 0
        %1201 = vmatprep.subr.bf16.mxu0 0
        %1202 = vmatpush1.bf16.xpose.msra.mxu0 0
        %1203 = vmatprep.subr.bf16.mxu0 0
        %1204 = vmatpush1.bf16.xpose.msra.mxu0 0
        %1205 = vmatprep.subr.bf16.mxu0 0
        %1206 = vmatpush1.bf16.xpose.msra.mxu0 0
        %1207 = vmatprep.subr.bf16.mxu0 0
        %1208 = vmatpush1.bf16.xpose.msra.mxu0 0
        %1209 = vmatprep.mubr.bf16.mxu0 0
        %1210 = vmatmul.mubr.bf16.gmra.mrb[0].mxu0 %v1175
        %v1211 = vpop.f32.mrb[0].mxu0
        %v1212 = vadd.f32 %v690, %v1211
        %v1213 = vpop.f32.mrb[0].mxu0
        %v1214 = vpop.f32.mrb[0].mxu0
        %v1215 = vpop.f32.mrb[0].mxu0
        %1216 = vdwg.mxu0
        %v1217 = vsel %vm785, %v1169, -inf
        %1218 = vmax.xlane.f32.xlu0 %v1217
        %v1219 = vpop.xlane.xlu0 %1218
        %v1220 = vsel %vm785, %v1212, -inf
        %1221 = vmax.xlane.f32.xlu0 %v1220
        %v1222 = vpop.xlane.xlu0 %1221
        %v1223 = vsub.f32 %v1169, %v1219
        %v1224 = vsub.f32 %v1212, %v1222
        %v1225 = vmul.f32 %v1223, 1.442695
        %v1226 = vpow.pop %v1225
        %v1227 = vmul.f32 %v1224, 1.442695
        %v1228 = vpow.pop %v1227
        %v1229 = vsel %vm785, %v1226, 0.0
        %1230 = vadd.xlane.f32.xlu0 %v1229
        %v1231 = vpop.xlane.xlu0 %1230
        %v1232 = vsel %vm785, %v1228, 0.0
        %1233 = vadd.xlane.f32.xlu0 %v1232
        %v1234 = vpop.xlane.xlu0 %1233
        %v1235 = vrcp.pop %v1231
        %v1236 = vrcp.pop %v1234
        %v1237 = vmul.f32 %v1226, %v1235
        %v1238 = vmul.f32 %v1228, %v1236
        %v1239 = vsel %vm1126, %v660, 0.0
        %v1240 = vsel %vm1126, %v663, 0.0
        %v1241 = vpack.c.bf16 %v1239, %v1239
        %v1242 = vpack.c.bf16 %v1240, %v1240
        %v1243 = vpack.c.bf16 %v1237, %v1237
        %v1244 = vpack.c.bf16 %v1238, %v1238
        %v1246 = vsel %vm785, %v1243, 0
        %v1249 = vsel %vm940, %v1241, 0
        %1251 = vmatprep.subr.bf16.mxu0 0
        %1252 = vmatpush1.bf16.msra.mxu0 %v1249
        %1253 = vmatprep.subr.bf16.mxu0 0
        %1254 = vmatpush1.bf16.msra.mxu0 0
        %1255 = vmatprep.subr.bf16.mxu0 0
        %1256 = vmatpush1.bf16.msra.mxu0 0
        %1257 = vmatprep.subr.bf16.mxu0 0
        %1258 = vmatpush1.bf16.msra.mxu0 0
        %1259 = vmatprep.subr.bf16.mxu0 0
        %1260 = vmatpush1.bf16.msra.mxu0 0
        %1261 = vmatprep.subr.bf16.mxu0 0
        %1262 = vmatpush1.bf16.msra.mxu0 0
        %1263 = vmatprep.subr.bf16.mxu0 0
        %1264 = vmatpush1.bf16.msra.mxu0 0
        %1265 = vmatprep.subr.bf16.mxu0 0
        %1266 = vmatpush1.bf16.msra.mxu0 0
        %1267 = vmatprep.subr.bf16.mxu0 0
        %1268 = vmatpush1.bf16.msra.mxu0 0
        %1269 = vmatprep.subr.bf16.mxu0 0
        %1270 = vmatpush1.bf16.msra.mxu0 0
        %1271 = vmatprep.subr.bf16.mxu0 0
        %1272 = vmatpush1.bf16.msra.mxu0 0
        %1273 = vmatprep.subr.bf16.mxu0 0
        %1274 = vmatpush1.bf16.msra.mxu0 0
        %1275 = vmatprep.subr.bf16.mxu0 0
        %1276 = vmatpush1.bf16.msra.mxu0 0
        %1277 = vmatprep.subr.bf16.mxu0 0
        %1278 = vmatpush1.bf16.msra.mxu0 0
        %1279 = vmatprep.subr.bf16.mxu0 0
        %1280 = vmatpush1.bf16.msra.mxu0 0
        %1281 = vmatprep.subr.bf16.mxu0 0
        %1282 = vmatpush1.bf16.msra.mxu0 0
        %1283 = vmatprep.mubr.bf16.mxu0 0
        %1284 = vmatmul.mubr.bf16.gmra.mrb[0].mxu0 %v1246
        %v1285 = vpop.f32.mrb[0].mxu0
        %v1286 = vadd.f32 0.0, %v1285
        %v1287 = vpop.f32.mrb[0].mxu0
        %v1288 = vpop.f32.mrb[0].mxu0
        %v1289 = vpop.f32.mrb[0].mxu0
        %1290 = vdwg.mxu0
        %v1292 = vsel %vm785, %v1244, 0
        %v1295 = vsel %vm940, %v1242, 0
        %1297 = vmatprep.subr.bf16.mxu0 0
        %1298 = vmatpush1.bf16.msra.mxu0 %v1295
        %1299 = vmatprep.subr.bf16.mxu0 0
        %1300 = vmatpush1.bf16.msra.mxu0 0
        %1301 = vmatprep.subr.bf16.mxu0 0
        %1302 = vmatpush1.bf16.msra.mxu0 0
        %1303 = vmatprep.subr.bf16.mxu0 0
        %1304 = vmatpush1.bf16.msra.mxu0 0
        %1305 = vmatprep.subr.bf16.mxu0 0
        %1306 = vmatpush1.bf16.msra.mxu0 0
        %1307 = vmatprep.subr.bf16.mxu0 0
        %1308 = vmatpush1.bf16.msra.mxu0 0
        %1309 = vmatprep.subr.bf16.mxu0 0
        %1310 = vmatpush1.bf16.msra.mxu0 0
        %1311 = vmatprep.subr.bf16.mxu0 0
        %1312 = vmatpush1.bf16.msra.mxu0 0
        %1313 = vmatprep.subr.bf16.mxu0 0
        %1314 = vmatpush1.bf16.msra.mxu0 0
        %1315 = vmatprep.subr.bf16.mxu0 0
        %1316 = vmatpush1.bf16.msra.mxu0 0
        %1317 = vmatprep.subr.bf16.mxu0 0
        %1318 = vmatpush1.bf16.msra.mxu0 0
        %1319 = vmatprep.subr.bf16.mxu0 0
        %1320 = vmatpush1.bf16.msra.mxu0 0
        %1321 = vmatprep.subr.bf16.mxu0 0
        %1322 = vmatpush1.bf16.msra.mxu0 0
        %1323 = vmatprep.subr.bf16.mxu0 0
        %1324 = vmatpush1.bf16.msra.mxu0 0
        %1325 = vmatprep.subr.bf16.mxu0 0
        %1326 = vmatpush1.bf16.msra.mxu0 0
        %1327 = vmatprep.subr.bf16.mxu0 0
        %1328 = vmatpush1.bf16.msra.mxu0 0
        %1329 = vmatprep.mubr.bf16.mxu0 0
        %1330 = vmatmul.mubr.bf16.gmra.mrb[0].mxu0 %v1292
        %v1331 = vpop.f32.mrb[0].mxu0
        %v1332 = vadd.f32 0.0, %v1331
        %v1333 = vpop.f32.mrb[0].mxu0
        %v1334 = vpop.f32.mrb[0].mxu0
        %v1335 = vpop.f32.mrb[0].mxu0
        %1336 = vdwg.mxu0
        %v1337 = vadd.f32 %v1071, %v1286
        %v1338 = vadd.f32 %v1117, %v1332
        %vm1339 = vcmp.ge.s32.totalorder %v671, 24
        %vm1340 = vcmp.lt.s32.totalorder %v671, 32
        %vm1341 = vmand %vm1339, %vm1340
        %v1342 = vsel %vm1341, 1, 0
        %vm1343 = vcmp.eq.s32.totalorder %v1342, 1
        %v1344 = vsel %vm1343, %v534, 0.0
        %v1345 = vsel %vm1343, %v537, 0.0
        %v1346 = vpack.c.bf16 %v1344, %v1344
        %v1347 = vpack.c.bf16 %v1345, %v1345
        %v1349 = vsel %vm495, %v1346, 0
        %1351 = vmatprep.subr.bf16.mxu0 0
        %1352 = vmatpush1.bf16.xpose.msra.mxu0 %v697
        %1353 = vmatprep.subr.bf16.mxu0 0
        %1354 = vmatpush1.bf16.xpose.msra.mxu0 0
        %1355 = vmatprep.subr.bf16.mxu0 0
        %1356 = vmatpush1.bf16.xpose.msra.mxu0 0
        %1357 = vmatprep.subr.bf16.mxu0 0
        %1358 = vmatpush1.bf16.xpose.msra.mxu0 0
        %1359 = vmatprep.subr.bf16.mxu0 0
        %1360 = vmatpush1.bf16.xpose.msra.mxu0 0
        %1361 = vmatprep.subr.bf16.mxu0 0
        %1362 = vmatpush1.bf16.xpose.msra.mxu0 0
        %1363 = vmatprep.subr.bf16.mxu0 0
        %1364 = vmatpush1.bf16.xpose.msra.mxu0 0
        %1365 = vmatprep.subr.bf16.mxu0 0
        %1366 = vmatpush1.bf16.xpose.msra.mxu0 0
        %1367 = vmatprep.subr.bf16.mxu0 0
        %1368 = vmatpush1.bf16.xpose.msra.mxu0 0
        %1369 = vmatprep.subr.bf16.mxu0 0
        %1370 = vmatpush1.bf16.xpose.msra.mxu0 0
        %1371 = vmatprep.subr.bf16.mxu0 0
        %1372 = vmatpush1.bf16.xpose.msra.mxu0 0
        %1373 = vmatprep.subr.bf16.mxu0 0
        %1374 = vmatpush1.bf16.xpose.msra.mxu0 0
        %1375 = vmatprep.subr.bf16.mxu0 0
        %1376 = vmatpush1.bf16.xpose.msra.mxu0 0
        %1377 = vmatprep.subr.bf16.mxu0 0
        %1378 = vmatpush1.bf16.xpose.msra.mxu0 0
        %1379 = vmatprep.subr.bf16.mxu0 0
        %1380 = vmatpush1.bf16.xpose.msra.mxu0 0
        %1381 = vmatprep.subr.bf16.mxu0 0
        %1382 = vmatpush1.bf16.xpose.msra.mxu0 0
        %1383 = vmatprep.mubr.bf16.mxu0 0
        %1384 = vmatmul.mubr.bf16.gmra.mrb[0].mxu0 %v1349
        %v1385 = vpop.f32.mrb[0].mxu0
        %v1386 = vadd.f32 %v686, %v1385
        %v1387 = vpop.f32.mrb[0].mxu0
        %v1388 = vpop.f32.mrb[0].mxu0
        %v1389 = vpop.f32.mrb[0].mxu0
        %1390 = vdwg.mxu0
        %v1392 = vsel %vm495, %v1347, 0
        %1394 = vmatprep.subr.bf16.mxu0 0
        %1395 = vmatpush1.bf16.xpose.msra.mxu0 %v743
        %1396 = vmatprep.subr.bf16.mxu0 0
        %1397 = vmatpush1.bf16.xpose.msra.mxu0 0
        %1398 = vmatprep.subr.bf16.mxu0 0
        %1399 = vmatpush1.bf16.xpose.msra.mxu0 0
        %1400 = vmatprep.subr.bf16.mxu0 0
        %1401 = vmatpush1.bf16.xpose.msra.mxu0 0
        %1402 = vmatprep.subr.bf16.mxu0 0
        %1403 = vmatpush1.bf16.xpose.msra.mxu0 0
        %1404 = vmatprep.subr.bf16.mxu0 0
        %1405 = vmatpush1.bf16.xpose.msra.mxu0 0
        %1406 = vmatprep.subr.bf16.mxu0 0
        %1407 = vmatpush1.bf16.xpose.msra.mxu0 0
        %1408 = vmatprep.subr.bf16.mxu0 0
        %1409 = vmatpush1.bf16.xpose.msra.mxu0 0
        %1410 = vmatprep.subr.bf16.mxu0 0
        %1411 = vmatpush1.bf16.xpose.msra.mxu0 0
        %1412 = vmatprep.subr.bf16.mxu0 0
        %1413 = vmatpush1.bf16.xpose.msra.mxu0 0
        %1414 = vmatprep.subr.bf16.mxu0 0
        %1415 = vmatpush1.bf16.xpose.msra.mxu0 0
        %1416 = vmatprep.subr.bf16.mxu0 0
        %1417 = vmatpush1.bf16.xpose.msra.mxu0 0
        %1418 = vmatprep.subr.bf16.mxu0 0
        %1419 = vmatpush1.bf16.xpose.msra.mxu0 0
        %1420 = vmatprep.subr.bf16.mxu0 0
        %1421 = vmatpush1.bf16.xpose.msra.mxu0 0
        %1422 = vmatprep.subr.bf16.mxu0 0
        %1423 = vmatpush1.bf16.xpose.msra.mxu0 0
        %1424 = vmatprep.subr.bf16.mxu0 0
        %1425 = vmatpush1.bf16.xpose.msra.mxu0 0
        %1426 = vmatprep.mubr.bf16.mxu0 0
        %1427 = vmatmul.mubr.bf16.gmra.mrb[0].mxu0 %v1392
        %v1428 = vpop.f32.mrb[0].mxu0
        %v1429 = vadd.f32 %v690, %v1428
        %v1430 = vpop.f32.mrb[0].mxu0
        %v1431 = vpop.f32.mrb[0].mxu0
        %v1432 = vpop.f32.mrb[0].mxu0
        %1433 = vdwg.mxu0
        %v1434 = vsel %vm785, %v1386, -inf
        %1435 = vmax.xlane.f32.xlu0 %v1434
        %v1436 = vpop.xlane.xlu0 %1435
        %v1437 = vsel %vm785, %v1429, -inf
        %1438 = vmax.xlane.f32.xlu0 %v1437
        %v1439 = vpop.xlane.xlu0 %1438
        %v1440 = vsub.f32 %v1386, %v1436
        %v1441 = vsub.f32 %v1429, %v1439
        %v1442 = vmul.f32 %v1440, 1.442695
        %v1443 = vpow.pop %v1442
        %v1444 = vmul.f32 %v1441, 1.442695
        %v1445 = vpow.pop %v1444
        %v1446 = vsel %vm785, %v1443, 0.0
        %1447 = vadd.xlane.f32.xlu0 %v1446
        %v1448 = vpop.xlane.xlu0 %1447
        %v1449 = vsel %vm785, %v1445, 0.0
        %1450 = vadd.xlane.f32.xlu0 %v1449
        %v1451 = vpop.xlane.xlu0 %1450
        %v1452 = vrcp.pop %v1448
        %v1453 = vrcp.pop %v1451
        %v1454 = vmul.f32 %v1443, %v1452
        %v1455 = vmul.f32 %v1445, %v1453
        %v1456 = vsel %vm1343, %v660, 0.0
        %v1457 = vsel %vm1343, %v663, 0.0
        %v1458 = vpack.c.bf16 %v1456, %v1456
        %v1459 = vpack.c.bf16 %v1457, %v1457
        %v1460 = vpack.c.bf16 %v1454, %v1454
        %v1461 = vpack.c.bf16 %v1455, %v1455
        %v1463 = vsel %vm785, %v1460, 0
        %v1466 = vsel %vm940, %v1458, 0
        %1468 = vmatprep.subr.bf16.mxu0 0
        %1469 = vmatpush1.bf16.msra.mxu0 %v1466
        %1470 = vmatprep.subr.bf16.mxu0 0
        %1471 = vmatpush1.bf16.msra.mxu0 0
        %1472 = vmatprep.subr.bf16.mxu0 0
        %1473 = vmatpush1.bf16.msra.mxu0 0
        %1474 = vmatprep.subr.bf16.mxu0 0
        %1475 = vmatpush1.bf16.msra.mxu0 0
        %1476 = vmatprep.subr.bf16.mxu0 0
        %1477 = vmatpush1.bf16.msra.mxu0 0
        %1478 = vmatprep.subr.bf16.mxu0 0
        %1479 = vmatpush1.bf16.msra.mxu0 0
        %1480 = vmatprep.subr.bf16.mxu0 0
        %1481 = vmatpush1.bf16.msra.mxu0 0
        %1482 = vmatprep.subr.bf16.mxu0 0
        %1483 = vmatpush1.bf16.msra.mxu0 0
        %1484 = vmatprep.subr.bf16.mxu0 0
        %1485 = vmatpush1.bf16.msra.mxu0 0
        %1486 = vmatprep.subr.bf16.mxu0 0
        %1487 = vmatpush1.bf16.msra.mxu0 0
        %1488 = vmatprep.subr.bf16.mxu0 0
        %1489 = vmatpush1.bf16.msra.mxu0 0
        %1490 = vmatprep.subr.bf16.mxu0 0
        %1491 = vmatpush1.bf16.msra.mxu0 0
        %1492 = vmatprep.subr.bf16.mxu0 0
        %1493 = vmatpush1.bf16.msra.mxu0 0
        %1494 = vmatprep.subr.bf16.mxu0 0
        %1495 = vmatpush1.bf16.msra.mxu0 0
        %1496 = vmatprep.subr.bf16.mxu0 0
        %1497 = vmatpush1.bf16.msra.mxu0 0
        %1498 = vmatprep.subr.bf16.mxu0 0
        %1499 = vmatpush1.bf16.msra.mxu0 0
        %1500 = vmatprep.mubr.bf16.mxu0 0
        %1501 = vmatmul.mubr.bf16.gmra.mrb[0].mxu0 %v1463
        %v1502 = vpop.f32.mrb[0].mxu0
        %v1503 = vadd.f32 0.0, %v1502
        %v1504 = vpop.f32.mrb[0].mxu0
        %v1505 = vpop.f32.mrb[0].mxu0
        %v1506 = vpop.f32.mrb[0].mxu0
        %1507 = vdwg.mxu0
        %v1509 = vsel %vm785, %v1461, 0
        %v1512 = vsel %vm940, %v1459, 0
        %1514 = vmatprep.subr.bf16.mxu0 0
        %1515 = vmatpush1.bf16.msra.mxu0 %v1512
        %1516 = vmatprep.subr.bf16.mxu0 0
        %1517 = vmatpush1.bf16.msra.mxu0 0
        %1518 = vmatprep.subr.bf16.mxu0 0
        %1519 = vmatpush1.bf16.msra.mxu0 0
        %1520 = vmatprep.subr.bf16.mxu0 0
        %1521 = vmatpush1.bf16.msra.mxu0 0
        %1522 = vmatprep.subr.bf16.mxu0 0
        %1523 = vmatpush1.bf16.msra.mxu0 0
        %1524 = vmatprep.subr.bf16.mxu0 0
        %1525 = vmatpush1.bf16.msra.mxu0 0
        %1526 = vmatprep.subr.bf16.mxu0 0
        %1527 = vmatpush1.bf16.msra.mxu0 0
        %1528 = vmatprep.subr.bf16.mxu0 0
        %1529 = vmatpush1.bf16.msra.mxu0 0
        %1530 = vmatprep.subr.bf16.mxu0 0
        %1531 = vmatpush1.bf16.msra.mxu0 0
        %1532 = vmatprep.subr.bf16.mxu0 0
        %1533 = vmatpush1.bf16.msra.mxu0 0
        %1534 = vmatprep.subr.bf16.mxu0 0
        %1535 = vmatpush1.bf16.msra.mxu0 0
        %1536 = vmatprep.subr.bf16.mxu0 0
        %1537 = vmatpush1.bf16.msra.mxu0 0
        %1538 = vmatprep.subr.bf16.mxu0 0
        %1539 = vmatpush1.bf16.msra.mxu0 0
        %1540 = vmatprep.subr.bf16.mxu0 0
        %1541 = vmatpush1.bf16.msra.mxu0 0
        %1542 = vmatprep.subr.bf16.mxu0 0
        %1543 = vmatpush1.bf16.msra.mxu0 0
        %1544 = vmatprep.subr.bf16.mxu0 0
        %1545 = vmatpush1.bf16.msra.mxu0 0
        %1546 = vmatprep.mubr.bf16.mxu0 0
        %1547 = vmatmul.mubr.bf16.gmra.mrb[0].mxu0 %v1509
        %v1548 = vpop.f32.mrb[0].mxu0
        %v1549 = vadd.f32 0.0, %v1548
        %v1550 = vpop.f32.mrb[0].mxu0
        %v1551 = vpop.f32.mrb[0].mxu0
        %v1552 = vpop.f32.mrb[0].mxu0
        %1553 = vdwg.mxu0
        %v1554 = vadd.f32 %v1337, %v1503
        %v1555 = vadd.f32 %v1338, %v1549
        %v1556 = vpack.c.bf16 %v1555, %v1554
        %v1557 = vld [vmem:[%s357] sm:$0xf]
        %v1558 = vld [vmem:[%s357 + $0x4] sm:$0xf]
        %v1559 = vld [vmem:[%s357 + $0x8] sm:$0xf]
        %v1560 = vld [vmem:[%s357 + $0xc] sm:$0xf]
        %v1561 = vld [vmem:[%s372 + $0x3] sm:$0x1]
        %v1562 = vlaneseq
        %v1563 = vshrl.u32 %v1562, 7
        %v1564 = vsub.s32 0, %v1563
        %v1565 = vrot.slane %v1561, %v1564
        %v1570 = vunpack.c.l.b16 %v1557
        %v1571 = vunpack.c.l.b16 %v1558
        %v1572 = vunpack.c.l.b16 %v1559
        %v1573 = vunpack.c.l.b16 %v1560
        %v1574 = vpack.c.b16 %v1571, %v1570
        %v1575 = vpack.c.b16 %v1573, %v1572
        %v1579 = vsel %vm495, %v1556, 0
        %1581 = vmatprep.subr.bf16.mxu0 0
        %1582 = vmatpush1.bf16.msra.mxu0 %v1574
        %1583 = vmatprep.subr.bf16.mxu0 0
        %1584 = vmatpush1.bf16.msra.mxu0 %v1575
        %1585 = vmatprep.subr.bf16.mxu0 0
        %1586 = vmatpush1.bf16.msra.mxu0 0
        %1587 = vmatprep.subr.bf16.mxu0 0
        %1588 = vmatpush1.bf16.msra.mxu0 0
        %1589 = vmatprep.subr.bf16.mxu0 0
        %1590 = vmatpush1.bf16.msra.mxu0 0
        %1591 = vmatprep.subr.bf16.mxu0 0
        %1592 = vmatpush1.bf16.msra.mxu0 0
        %1593 = vmatprep.subr.bf16.mxu0 0
        %1594 = vmatpush1.bf16.msra.mxu0 0
        %1595 = vmatprep.subr.bf16.mxu0 0
        %1596 = vmatpush1.bf16.msra.mxu0 0
        %1597 = vmatprep.subr.bf16.mxu0 0
        %1598 = vmatpush1.bf16.msra.mxu0 0
        %1599 = vmatprep.subr.bf16.mxu0 0
        %1600 = vmatpush1.bf16.msra.mxu0 0
        %1601 = vmatprep.subr.bf16.mxu0 0
        %1602 = vmatpush1.bf16.msra.mxu0 0
        %1603 = vmatprep.subr.bf16.mxu0 0
        %1604 = vmatpush1.bf16.msra.mxu0 0
        %1605 = vmatprep.subr.bf16.mxu0 0
        %1606 = vmatpush1.bf16.msra.mxu0 0
        %1607 = vmatprep.subr.bf16.mxu0 0
        %1608 = vmatpush1.bf16.msra.mxu0 0
        %1609 = vmatprep.subr.bf16.mxu0 0
        %1610 = vmatpush1.bf16.msra.mxu0 0
        %1611 = vmatprep.subr.bf16.mxu0 0
        %1612 = vmatpush1.bf16.msra.mxu0 0
        %1613 = vmatprep.mubr.bf16.mxu0 0
        %1614 = vmatmul.mubr.bf16.gmra.mrb[0].mxu0 %v1579
        %v1615 = vpop.f32.mrb[0].mxu0
        %v1616 = vadd.f32 %v1565, %v1615
        %v1617 = vpop.f32.mrb[0].mxu0
        %v1618 = vpop.f32.mrb[0].mxu0
        %v1619 = vadd.f32 %v1565, %v1618
        %v1620 = vpop.f32.mrb[0].mxu0
        %1621 = vdwg.mxu0
        %v1622 = vadd.f32 %v471, %v1616
        %v1623 = vadd.f32 %v472, %v1619
        %v1624 = vld [vmem:[%s372 + $0x4] sm:$0x1]
        %v1625 = vld [vmem:[%s372 + $0x5] sm:$0x1]
        %v1626 = vsel %vm495, %v1622, 0.0
        %1627 = vadd.xlane.f32.xlu0 %v1626
        %v1628 = vpop.xlane.xlu0 %1627
        %v1629 = vsel %vm495, %v1623, 0.0
        %1630 = vadd.xlane.f32.xlu0 %v1629
        %v1631 = vpop.xlane.xlu0 %1630
        %v1632 = vrcp.pop 32.0
        %v1633 = vmul.f32 %v1628, %v1632
        %v1634 = vmul.f32 %v1631, %v1632
        %v1635 = vsub.f32 %v1622, %v1633
        %v1636 = vsub.f32 %v1623, %v1634
        %v1637 = vmul.f32 %v1635, %v1635
        %v1638 = vmul.f32 %v1636, %v1636
        %v1639 = vsel %vm495, %v1637, 0.0
        %1640 = vadd.xlane.f32.xlu0 %v1639
        %v1641 = vpop.xlane.xlu0 %1640
        %v1642 = vsel %vm495, %v1638, 0.0
        %1643 = vadd.xlane.f32.xlu0 %v1642
        %v1644 = vpop.xlane.xlu0 %1643
        %v1645 = vmul.f32 %v1641, %v1632
        %v1646 = vmul.f32 %v1644, %v1632
        %v1647 = vadd.f32 %v1645, 1e-12
        %v1648 = vadd.f32 %v1646, 1e-12
        %v1649 = vrsqrt.pop %v1647
        %v1650 = vrsqrt.pop %v1648
        %v1651 = vmul.f32 %v1635, %v1649
        %v1652 = vmul.f32 %v1636, %v1650
        %v1653 = vlaneseq
        %v1654 = vshrl.u32 %v1653, 7
        %v1655 = vsub.s32 0, %v1654
        %v1656 = vrot.slane %v1624, %v1655
        %v1657 = vmul.f32 %v1651, %v1656
        %v1658 = vmul.f32 %v1652, %v1656
        %v1659 = vlaneseq
        %v1660 = vshrl.u32 %v1659, 7
        %v1661 = vsub.s32 0, %v1660
        %v1662 = vrot.slane %v1625, %v1661
        %v1663 = vadd.f32 %v1657, %v1662
        %v1664 = vadd.f32 %v1658, %v1662
        %v1665 = vpack.c.bf16 %v1664, %v1663
        %v1666 = vld [vmem:[%s362] sm:$0xf]
        %v1667 = vld [vmem:[%s362 + $0x4] sm:$0xf]
        %v1668 = vld [vmem:[%s362 + $0x8] sm:$0xf]
        %v1669 = vld [vmem:[%s362 + $0xc] sm:$0xf]
        %v1670 = vld [vmem:[%s372 + $0x9] sm:$0x1]
        %v1671 = vlaneseq
        %v1672 = vshrl.u32 %v1671, 7
        %v1673 = vsub.s32 0, %v1672
        %v1674 = vrot.slane %v1670, %v1673
        %v1679 = vunpack.c.l.b16 %v1666
        %v1680 = vunpack.c.l.b16 %v1667
        %v1681 = vunpack.c.l.b16 %v1668
        %v1682 = vunpack.c.l.b16 %v1669
        %v1683 = vpack.c.b16 %v1680, %v1679
        %v1684 = vpack.c.b16 %v1682, %v1681
        %v1688 = vsel %vm495, %v1665, 0
        %1690 = vmatprep.subr.bf16.mxu0 0
        %1691 = vmatpush1.bf16.msra.mxu0 %v1683
        %1692 = vmatprep.subr.bf16.mxu0 0
        %1693 = vmatpush1.bf16.msra.mxu0 %v1684
        %1694 = vmatprep.subr.bf16.mxu0 0
        %1695 = vmatpush1.bf16.msra.mxu0 0
        %1696 = vmatprep.subr.bf16.mxu0 0
        %1697 = vmatpush1.bf16.msra.mxu0 0
        %1698 = vmatprep.subr.bf16.mxu0 0
        %1699 = vmatpush1.bf16.msra.mxu0 0
        %1700 = vmatprep.subr.bf16.mxu0 0
        %1701 = vmatpush1.bf16.msra.mxu0 0
        %1702 = vmatprep.subr.bf16.mxu0 0
        %1703 = vmatpush1.bf16.msra.mxu0 0
        %1704 = vmatprep.subr.bf16.mxu0 0
        %1705 = vmatpush1.bf16.msra.mxu0 0
        %1706 = vmatprep.subr.bf16.mxu0 0
        %1707 = vmatpush1.bf16.msra.mxu0 0
        %1708 = vmatprep.subr.bf16.mxu0 0
        %1709 = vmatpush1.bf16.msra.mxu0 0
        %1710 = vmatprep.subr.bf16.mxu0 0
        %1711 = vmatpush1.bf16.msra.mxu0 0
        %1712 = vmatprep.subr.bf16.mxu0 0
        %1713 = vmatpush1.bf16.msra.mxu0 0
        %1714 = vmatprep.subr.bf16.mxu0 0
        %1715 = vmatpush1.bf16.msra.mxu0 0
        %1716 = vmatprep.subr.bf16.mxu0 0
        %1717 = vmatpush1.bf16.msra.mxu0 0
        %1718 = vmatprep.subr.bf16.mxu0 0
        %1719 = vmatpush1.bf16.msra.mxu0 0
        %1720 = vmatprep.subr.bf16.mxu0 0
        %1721 = vmatpush1.bf16.msra.mxu0 0
        %1722 = vmatprep.mubr.bf16.mxu0 0
        %1723 = vmatmul.mubr.bf16.gmra.mrb[0].mxu0 %v1688
        %v1724 = vpop.f32.mrb[0].mxu0
        %v1725 = vadd.f32 %v1674, %v1724
        %v1726 = vpop.f32.mrb[0].mxu0
        %v1727 = vpop.f32.mrb[0].mxu0
        %v1728 = vadd.f32 %v1674, %v1727
        %v1729 = vpop.f32.mrb[0].mxu0
        %1730 = vdwg.mxu0
        %v1731 = vmul.f32 %v1725, 0.5
        %v1732 = vmul.f32 %v1728, 0.5
        %v1733 = vmul.f32 %v1725, 0.044715
        %v1734 = vmul.f32 %v1728, 0.044715
        %v1735 = vmul.f32 %v1733, %v1725
        %v1736 = vmul.f32 %v1734, %v1728
        %v1737 = vmul.f32 %v1735, %v1725
        %v1738 = vmul.f32 %v1736, %v1728
        %v1739 = vadd.f32 %v1725, %v1737
        %v1740 = vadd.f32 %v1728, %v1738
        %v1741 = vmul.f32 %v1739, 0.7978846
        %v1742 = vmul.f32 %v1740, 0.7978846
        %v1743 = vtanh.pop %v1741
        %v1744 = vtanh.pop %v1742
        %v1745 = vadd.f32 %v1743, 1.0
        %v1746 = vadd.f32 %v1744, 1.0
        %v1747 = vmul.f32 %v1731, %v1745
        %v1748 = vmul.f32 %v1732, %v1746
        %v1749 = vpack.c.bf16 %v1748, %v1747
        %v1750 = vld [vmem:[%s367] sm:$0xf]
        %v1751 = vld [vmem:[%s367 + $0x4] sm:$0xf]
        %v1752 = vld [vmem:[%s367 + $0x8] sm:$0xf]
        %v1753 = vld [vmem:[%s367 + $0xc] sm:$0xf]
        %v1754 = vld [vmem:[%s367 + $0x10] sm:$0xf]
        %v1755 = vld [vmem:[%s367 + $0x14] sm:$0xf]
        %v1756 = vld [vmem:[%s367 + $0x18] sm:$0xf]
        %v1757 = vld [vmem:[%s367 + $0x1c] sm:$0xf]
        %v1758 = vld [vmem:[%s372 + $0x6] sm:$0x1]
        %v1759 = vlaneseq
        %v1760 = vshrl.u32 %v1759, 7
        %v1761 = vsub.s32 0, %v1760
        %v1762 = vrot.slane %v1758, %v1761
        %v1771 = vunpack.c.l.b16 %v1750
        %v1772 = vunpack.c.l.b16 %v1751
        %v1773 = vunpack.c.l.b16 %v1752
        %v1774 = vunpack.c.l.b16 %v1753
        %v1775 = vunpack.c.l.b16 %v1754
        %v1776 = vunpack.c.l.b16 %v1755
        %v1777 = vunpack.c.l.b16 %v1756
        %v1778 = vunpack.c.l.b16 %v1757
        %v1779 = vpack.c.b16 %v1772, %v1771
        %v1780 = vpack.c.b16 %v1774, %v1773
        %v1781 = vpack.c.b16 %v1776, %v1775
        %v1782 = vpack.c.b16 %v1778, %v1777
        %vm1787 = vcmask 523264
        %v1789 = vsel %vm1787, %v1749, 0
        %1791 = vmatprep.subr.bf16.mxu0 0
        %1792 = vmatpush1.bf16.msra.mxu0 %v1779
        %1793 = vmatprep.subr.bf16.mxu0 0
        %1794 = vmatpush1.bf16.msra.mxu0 %v1780
        %1795 = vmatprep.subr.bf16.mxu0 0
        %1796 = vmatpush1.bf16.msra.mxu0 %v1781
        %1797 = vmatprep.subr.bf16.mxu0 0
        %1798 = vmatpush1.bf16.msra.mxu0 %v1782
        %1799 = vmatprep.subr.bf16.mxu0 0
        %1800 = vmatpush1.bf16.msra.mxu0 0
        %1801 = vmatprep.subr.bf16.mxu0 0
        %1802 = vmatpush1.bf16.msra.mxu0 0
        %1803 = vmatprep.subr.bf16.mxu0 0
        %1804 = vmatpush1.bf16.msra.mxu0 0
        %1805 = vmatprep.subr.bf16.mxu0 0
        %1806 = vmatpush1.bf16.msra.mxu0 0
        %1807 = vmatprep.subr.bf16.mxu0 0
        %1808 = vmatpush1.bf16.msra.mxu0 0
        %1809 = vmatprep.subr.bf16.mxu0 0
        %1810 = vmatpush1.bf16.msra.mxu0 0
        %1811 = vmatprep.subr.bf16.mxu0 0
        %1812 = vmatpush1.bf16.msra.mxu0 0
        %1813 = vmatprep.subr.bf16.mxu0 0
        %1814 = vmatpush1.bf16.msra.mxu0 0
        %1815 = vmatprep.subr.bf16.mxu0 0
        %1816 = vmatpush1.bf16.msra.mxu0 0
        %1817 = vmatprep.subr.bf16.mxu0 0
        %1818 = vmatpush1.bf16.msra.mxu0 0
        %1819 = vmatprep.subr.bf16.mxu0 0
        %1820 = vmatpush1.bf16.msra.mxu0 0
        %1821 = vmatprep.subr.bf16.mxu0 0
        %1822 = vmatpush1.bf16.msra.mxu0 0
        %1823 = vmatprep.mubr.bf16.mxu0 0
        %1824 = vmatmul.mubr.bf16.gmra.mrb[0].mxu0 %v1789
        %v1825 = vpop.f32.mrb[0].mxu0
        %v1826 = vadd.f32 %v1762, %v1825
        %v1827 = vpop.f32.mrb[0].mxu0
        %v1828 = vpop.f32.mrb[0].mxu0
        %v1829 = vadd.f32 %v1762, %v1828
        %v1830 = vpop.f32.mrb[0].mxu0
        %1831 = vdwg.mxu0
        %v1832 = vadd.f32 %v1663, %v1826
        %v1833 = vadd.f32 %v1664, %v1829
        %v1834 = vld [vmem:[%s372 + $0x7] sm:$0x1]
        %v1835 = vld [vmem:[%s372 + $0x8] sm:$0x1]
        %v1836 = vsel %vm495, %v1832, 0.0
        %1837 = vadd.xlane.f32.xlu0 %v1836
        %v1838 = vpop.xlane.xlu0 %1837
        %v1839 = vsel %vm495, %v1833, 0.0
        %1840 = vadd.xlane.f32.xlu0 %v1839
        %v1841 = vpop.xlane.xlu0 %1840
        %v1842 = vmul.f32 %v1838, %v1632
        %v1843 = vmul.f32 %v1841, %v1632
        %v1844 = vsub.f32 %v1832, %v1842
        %v1845 = vsub.f32 %v1833, %v1843
        %v1846 = vmul.f32 %v1844, %v1844
        %v1847 = vmul.f32 %v1845, %v1845
        %v1848 = vsel %vm495, %v1846, 0.0
        %1849 = vadd.xlane.f32.xlu0 %v1848
        %v1850 = vpop.xlane.xlu0 %1849
        %v1851 = vsel %vm495, %v1847, 0.0
        %1852 = vadd.xlane.f32.xlu0 %v1851
        %v1853 = vpop.xlane.xlu0 %1852
        %v1854 = vmul.f32 %v1850, %v1632
        %v1855 = vmul.f32 %v1853, %v1632
        %v1856 = vadd.f32 %v1854, 1e-12
        %v1857 = vadd.f32 %v1855, 1e-12
        %v1858 = vrsqrt.pop %v1856
        %v1859 = vrsqrt.pop %v1857
        %v1860 = vmul.f32 %v1844, %v1858
        %v1861 = vmul.f32 %v1845, %v1859
        %v1862 = vlaneseq
        %v1863 = vshrl.u32 %v1862, 7
        %v1864 = vsub.s32 0, %v1863
        %v1865 = vrot.slane %v1834, %v1864
        %v1866 = vmul.f32 %v1860, %v1865
        %v1867 = vmul.f32 %v1861, %v1865
        %v1868 = vlaneseq
        %v1869 = vshrl.u32 %v1868, 7
        %v1870 = vsub.s32 0, %v1869
        %v1871 = vrot.slane %v1835, %v1870
        %v1872 = vadd.f32 %v1866, %v1871
        %v1873 = vadd.f32 %v1867, %v1871
        %1874 = vst.msk [vmem:[#allocation2] sm:$0xff] %vm495, %v1872
        %1875 = vst.msk [vmem:[#allocation2 + $0x8] sm:$0xff] %vm495, %v1873
        %p1876 = scmp.eq.s32.totalorder %s21, 1
        // Predicated region
        $region92: #{bert_classification_forward.1} parent=51 // pred_check
          %p1877 = pneg %p1876
        $region93: #{bert_classification_forward.1} parent=51 // pred_check_branch
          %1879 = sbr.rel (%p1877) target = $region95
        $region94: #{bert_classification_forward.1} parent=51 // pred_region
          %v1880 = vpack.c.bf16 %v1872, %v1872
          %v1881 = vpack.c.bf16 %v1873, %v1873
          %v1882 = vld [vmem:[%s7] sm:$0xf]
          %v1883 = vld [vmem:[%s7 + $0x4] sm:$0xf]
          %v1884 = vld [vmem:[%s7 + $0x8] sm:$0xf]
          %v1885 = vld [vmem:[%s7 + $0xc] sm:$0xf]
          %v1886 = vld [vmem:[%s8 + $0x2] sm:$0x1]
          %v1887 = vlaneseq
          %v1888 = vshrl.u32 %v1887, 7
          %v1889 = vsub.s32 0, %v1888
          %v1890 = vrot.slane %v1886, %v1889
          %v1893 = vunpack.c.l.b16 %v1880
          %v1894 = vunpack.c.l.b16 %v1881
          %v1895 = vrot.slane %v1894, 7
          %vm1896 = vcmask 1041409
          %v1897 = vsel %vm1896, %v1895, %v1893
          %v1898 = vpack.c.b16 %v1897, %v1897
          %v1903 = vunpack.c.l.b16 %v1882
          %v1904 = vunpack.c.l.b16 %v1883
          %v1905 = vunpack.c.l.b16 %v1884
          %v1906 = vunpack.c.l.b16 %v1885
          %v1907 = vpack.c.b16 %v1904, %v1903
          %v1908 = vpack.c.b16 %v1906, %v1905
          %v1912 = vsel %vm495, %v1898, 0
          %1914 = vmatprep.subr.bf16.mxu0 0
          %1915 = vmatpush1.bf16.msra.mxu0 %v1907
          %1916 = vmatprep.subr.bf16.mxu0 0
          %1917 = vmatpush1.bf16.msra.mxu0 %v1908
          %1918 = vmatprep.subr.bf16.mxu0 0
          %1919 = vmatpush1.bf16.msra.mxu0 0
          %1920 = vmatprep.subr.bf16.mxu0 0
          %1921 = vmatpush1.bf16.msra.mxu0 0
          %1922 = vmatprep.subr.bf16.mxu0 0
          %1923 = vmatpush1.bf16.msra.mxu0 0
          %1924 = vmatprep.subr.bf16.mxu0 0
          %1925 = vmatpush1.bf16.msra.mxu0 0
          %1926 = vmatprep.subr.bf16.mxu0 0
          %1927 = vmatpush1.bf16.msra.mxu0 0
          %1928 = vmatprep.subr.bf16.mxu0 0
          %1929 = vmatpush1.bf16.msra.mxu0 0
          %1930 = vmatprep.subr.bf16.mxu0 0
          %1931 = vmatpush1.bf16.msra.mxu0 0
          %1932 = vmatprep.subr.bf16.mxu0 0
          %1933 = vmatpush1.bf16.msra.mxu0 0
          %1934 = vmatprep.subr.bf16.mxu0 0
          %1935 = vmatpush1.bf16.msra.mxu0 0
          %1936 = vmatprep.subr.bf16.mxu0 0
          %1937 = vmatpush1.bf16.msra.mxu0 0
          %1938 = vmatprep.subr.bf16.mxu0 0
          %1939 = vmatpush1.bf16.msra.mxu0 0
          %1940 = vmatprep.subr.bf16.mxu0 0
          %1941 = vmatpush1.bf16.msra.mxu0 0
          %1942 = vmatprep.subr.bf16.mxu0 0
          %1943 = vmatpush1.bf16.msra.mxu0 0
          %1944 = vmatprep.subr.bf16.mxu0 0
          %1945 = vmatpush1.bf16.msra.mxu0 0
          %1946 = vmatprep.mubr.bf16.mxu0 0
          %1947 = vmatmul.mubr.bf16.gmra.mrb[0].mxu0 %v1912
          %v1948 = vpop.f32.mrb[0].mxu0
          %v1949 = vadd.f32 %v1890, %v1948
          %v1950 = vpop.f32.mrb[0].mxu0
          %v1951 = vpop.f32.mrb[0].mxu0
          %v1952 = vpop.f32.mrb[0].mxu0
          %1953 = vdwg.mxu0
          %v1954 = vtanh.pop %v1949
          %v1955 = vpack.c.bf16 %v1954, %v1954
          %v1956 = vld [vmem:[%s7 + $0x10] sm:$0xf]
          %v1957 = vld [vmem:[%s7 + $0x14] sm:$0xf]
          %v1958 = vld [vmem:[%s7 + $0x18] sm:$0xf]
          %v1959 = vld [vmem:[%s7 + $0x1c] sm:$0xf]
          %v1960 = vld [vmem:[%s8 + $0x3] sm:$0x1]
          %v1961 = vlaneseq
          %v1962 = vshrl.u32 %v1961, 7
          %v1963 = vsub.s32 0, %v1962
          %v1964 = vrot.slane %v1960, %v1963
          %v1969 = vunpack.c.l.b16 %v1956
          %v1970 = vunpack.c.l.b16 %v1957
          %v1971 = vunpack.c.l.b16 %v1958
          %v1972 = vunpack.c.l.b16 %v1959
          %v1973 = vpack.c.b16 %v1970, %v1969
          %v1974 = vpack.c.b16 %v1972, %v1971
          %v1978 = vsel %vm495, %v1955, 0
          %1980 = vmatprep.subr.bf16.mxu0 0
          %1981 = vmatpush1.bf16.msra.mxu0 %v1973
          %1982 = vmatprep.subr.bf16.mxu0 0
          %1983 = vmatpush1.bf16.msra.mxu0 %v1974
          %1984 = vmatprep.subr.bf16.mxu0 0
          %1985 = vmatpush1.bf16.msra.mxu0 0
          %1986 = vmatprep.subr.bf16.mxu0 0
          %1987 = vmatpush1.bf16.msra.mxu0 0
          %1988 = vmatprep.subr.bf16.mxu0 0
          %1989 = vmatpush1.bf16.msra.mxu0 0
          %1990 = vmatprep.subr.bf16.mxu0 0
          %1991 = vmatpush1.bf16.msra.mxu0 0
          %1992 = vmatprep.subr.bf16.mxu0 0
          %1993 = vmatpush1.bf16.msra.mxu0 0
          %1994 = vmatprep.subr.bf16.mxu0 0
          %1995 = vmatpush1.bf16.msra.mxu0 0
          %1996 = vmatprep.subr.bf16.mxu0 0
          %1997 = vmatpush1.bf16.msra.mxu0 0
          %1998 = vmatprep.subr.bf16.mxu0 0
          %1999 = vmatpush1.bf16.msra.mxu0 0
          %2000 = vmatprep.subr.bf16.mxu0 0
          %2001 = vmatpush1.bf16.msra.mxu0 0
          %2002 = vmatprep.subr.bf16.mxu0 0
          %2003 = vmatpush1.bf16.msra.mxu0 0
          %2004 = vmatprep.subr.bf16.mxu0 0
          %2005 = vmatpush1.bf16.msra.mxu0 0
          %2006 = vmatprep.subr.bf16.mxu0 0
          %2007 = vmatpush1.bf16.msra.mxu0 0
          %2008 = vmatprep.subr.bf16.mxu0 0
          %2009 = vmatpush1.bf16.msra.mxu0 0
          %2010 = vmatprep.subr.bf16.mxu0 0
          %2011 = vmatpush1.bf16.msra.mxu0 0
          %2012 = vmatprep.mubr.bf16.mxu0 0
          %2013 = vmatmul.mubr.bf16.gmra.mrb[0].mxu0 %v1978
          %v2014 = vpop.f32.mrb[0].mxu0
          %v2015 = vadd.f32 %v1964, %v2014
          %v2016 = vpop.f32.mrb[0].mxu0
          %v2017 = vpop.f32.mrb[0].mxu0
          %v2018 = vpop.f32.mrb[0].mxu0
          %2019 = vdwg.mxu0
          %v2020 = vpack.c.bf16 %v2015, %v2015
          %v2021 = vld [vmem:[%s7 + $0x20] sm:$0xf]
          %v2022 = vld [vmem:[%s7 + $0x24] sm:$0xf]
          %v2023 = vld [vmem:[%s7 + $0x28] sm:$0xf]
          %v2024 = vld [vmem:[%s7 + $0x2c] sm:$0xf]
          %v2025 = vld [vmem:[%s7 + $0x30] sm:$0xf]
          %v2026 = vld [vmem:[%s7 + $0x34] sm:$0xf]
          %v2027 = vld [vmem:[%s7 + $0x38] sm:$0xf]
          %v2028 = vld [vmem:[%s7 + $0x3c] sm:$0xf]
          %v2029 = vld [vmem:[%s7 + $0x40] sm:$0xf]
          %v2030 = vld [vmem:[%s7 + $0x44] sm:$0xf]
          %v2031 = vld [vmem:[%s7 + $0x48] sm:$0xf]
          %v2032 = vld [vmem:[%s7 + $0x4c] sm:$0xf]
          %v2033 = vld [vmem:[%s7 + $0x50] sm:$0xf]
          %v2034 = vld [vmem:[%s7 + $0x54] sm:$0xf]
          %v2035 = vld [vmem:[%s7 + $0x58] sm:$0xf]
          %v2036 = vld [vmem:[%s7 + $0x5c] sm:$0xf]
          %v2037 = vld [vmem:[%s8 + $0x4] sm:$0x1]
          %v2038 = vlaneseq
          %v2039 = vshrl.u32 %v2038, 7
          %v2040 = vsub.s32 0, %v2039
          %v2041 = vrot.slane %v2037, %v2040
          %v2058 = vunpack.c.l.b16 %v2021
          %v2059 = vunpack.c.l.b16 %v2022
          %v2060 = vunpack.c.l.b16 %v2023
          %v2061 = vunpack.c.l.b16 %v2024
          %v2062 = vunpack.c.l.b16 %v2025
          %v2063 = vunpack.c.l.b16 %v2026
          %v2064 = vunpack.c.l.b16 %v2027
          %v2065 = vunpack.c.l.b16 %v2028
          %v2066 = vunpack.c.l.b16 %v2029
          %v2067 = vunpack.c.l.b16 %v2030
          %v2068 = vunpack.c.l.b16 %v2031
          %v2069 = vunpack.c.l.b16 %v2032
          %v2070 = vunpack.c.l.b16 %v2033
          %v2071 = vunpack.c.l.b16 %v2034
          %v2072 = vunpack.c.l.b16 %v2035
          %v2073 = vunpack.c.l.b16 %v2036
          %v2074 = vpack.c.b16 %v2059, %v2058
          %v2075 = vpack.c.b16 %v2061, %v2060
          %v2076 = vpack.c.b16 %v2063, %v2062
          %v2077 = vpack.c.b16 %v2065, %v2064
          %v2078 = vpack.c.b16 %v2067, %v2066
          %v2079 = vpack.c.b16 %v2069, %v2068
          %v2080 = vpack.c.b16 %v2071, %v2070
          %v2081 = vpack.c.b16 %v2073, %v2072
          %2090 = vmatprep.subr.bf16.mxu0 0
          %2091 = vmatpush1.bf16.msra.mxu0 %v2074
          %2092 = vmatprep.subr.bf16.mxu0 0
          %2093 = vmatpush1.bf16.msra.mxu0 %v2075
          %2094 = vmatprep.subr.bf16.mxu0 0
          %2095 = vmatpush1.bf16.msra.mxu0 %v2076
          %2096 = vmatprep.subr.bf16.mxu0 0
          %2097 = vmatpush1.bf16.msra.mxu0 %v2077
          %2098 = vmatprep.subr.bf16.mxu0 0
          %2099 = vmatpush1.bf16.msra.mxu0 %v2078
          %2100 = vmatprep.subr.bf16.mxu0 0
          %2101 = vmatpush1.bf16.msra.mxu0 %v2079
          %2102 = vmatprep.subr.bf16.mxu0 0
          %2103 = vmatpush1.bf16.msra.mxu0 %v2080
          %2104 = vmatprep.subr.bf16.mxu0 0
          %2105 = vmatpush1.bf16.msra.mxu0 %v2081
          %2106 = vmatprep.subr.bf16.mxu0 0
          %2107 = vmatpush1.bf16.msra.mxu0 0
          %2108 = vmatprep.subr.bf16.mxu0 0
          %2109 = vmatpush1.bf16.msra.mxu0 0
          %2110 = vmatprep.subr.bf16.mxu0 0
          %2111 = vmatpush1.bf16.msra.mxu0 0
          %2112 = vmatprep.subr.bf16.mxu0 0
          %2113 = vmatpush1.bf16.msra.mxu0 0
          %2114 = vmatprep.subr.bf16.mxu0 0
          %2115 = vmatpush1.bf16.msra.mxu0 0
          %2116 = vmatprep.subr.bf16.mxu0 0
          %2117 = vmatpush1.bf16.msra.mxu0 0
          %2118 = vmatprep.subr.bf16.mxu0 0
          %2119 = vmatpush1.bf16.msra.mxu0 0
          %2120 = vmatprep.subr.bf16.mxu0 0
          %2121 = vmatpush1.bf16.msra.mxu0 0
          %2122 = vmatprep.mubr.bf16.mxu0 0
          %2123 = vmatmul.mubr.bf16.gmra.mrb[0].mxu0 %v2020
          %v2124 = vpop.f32.mrb[0].mxu0
          %v2125 = vadd.f32 %v2041, %v2124
          %v2126 = vpop.f32.mrb[0].mxu0
          %v2127 = vpop.f32.mrb[0].mxu0
          %v2128 = vpop.f32.mrb[0].mxu0
          %2129 = vdwg.mxu0
          %2130 = vst [vmem:[#allocation3] sm:$0x3] %v2125
        $region95: #{bert_classification_forward.1} parent=51 // pred_fallthru
          _
        // Predicated region
        $region96: #{bert_classification_forward.1} parent=51 // pred_check
          %p2131 = pneg %p227
        $region97: #{bert_classification_forward.1} parent=51 // pred_check_branch
          %2133 = sbr.rel (%p2131) target = $region99
        $region98: #{bert_classification_forward.1} parent=51 // pred_region
          %s2135 = ssub.s32 32, 32
          %2136 = vsyncadd [#allocation4], %s2135
          %s2138 = sshll.u32 [#allocation3], 4
          %s2139 = int_to_ptr.vmem [resolvable:$true] %s2138
          %2141 = dma.vmem_to_hbm [thread:$0]  %s2139, 32, %s9, [#allocation4]
        $region99: #{bert_classification_forward.1} parent=51 // pred_fallthru
          _
        // Predicated region
        $region100: #{bert_classification_forward.1} parent=51 // pred_check
          %p2142 = pneg %p227
        $region101: #{bert_classification_forward.1} parent=51 // pred_check_branch
          %2144 = sbr.rel (%p2142) target = $region103
        $region102: #{bert_classification_forward.1} parent=51 // pred_region
          %2145 = dma.done [#allocation4], 32
        $region103: #{bert_classification_forward.1} parent=51 // pred_fallthru
          _
      $region52: #{bert_classification_forward.1} parent=5 // pred_fallthru
        _
      %p2146 = scmp.le.s32.totalorder 2, %s16
      // Predicated region
      $region104: #{bert_classification_forward.1} parent=5 // pred_check
        %p2147 = pneg %p2146
      $region105: #{bert_classification_forward.1} parent=5 // pred_check_branch
        %2149 = sbr.rel (%p2147) target = $region107
      $region106: #{bert_classification_forward.1} parent=5 // pred_region
        %s2150 = ssub.s32 %s16, 2
      $region107: #{bert_classification_forward.1} parent=5 // pred_fallthru
        _
    $region6: #{bert_classification_forward.1} parent=1 // loop_footer
      %s20 = sadd.s32 1, %s16
    $region7: #{bert_classification_forward.1} parent=1 // loop_footer_branch
      %15 = sbr.rel target = $region3
    $region8: #{bert_classification_forward.1} parent=1 // loop_exit
      _
    %2151 = vsyncpa [#allocation4], 1
    %s2152 = scalar_lea.sflag [#allocation4], 1
    %2153 = vsyncpa %s2152, 1

</llo_original>
